<compile_context>
chip_gen: v7x
topology: tpu7x:2x2x1
jax: 0.10.0
libtpu: 0.0.40
codegen_flags: <defaults>
</compile_context>

<pallas_src>
import functools

import jax
import jax.numpy as jnp
from jax import lax
from jax.experimental import pallas as pl
from jax.experimental.pallas import tpu as pltpu

EPSILON = 1e-6
NORM_EPS = 1e-12  # F.normalize default eps
VMEM_LIMIT = 64 * 1024 * 1024


def _tile(full, pref):
    """Largest TPU-friendly tile <= pref that evenly divides `full`."""
    if full <= pref:
        return full
    for cand in (pref, pref // 2, pref // 4):
        if cand >= 8 and full % cand == 0:
            return cand
    return full  # fall back to full extent (always legal)


def _scaled_l2norm(t, scale, eps):
    """t / max(||t||, eps) * scale, with rsqrt on the EUP (f32)."""
    n2 = jnp.sum(t * t, axis=-1, keepdims=True)
    return t * (lax.rsqrt(jnp.maximum(n2, eps * eps)) * scale)


# ----------------------------------------------------------------------------
# Fused QKV projection kernel:
#   x (B, N, dim) bf16, w_qkv (H, dim, 3D) bf16  ->  q, k, v (B, H, N, D) bf16
#   q/k l2-normalized; q additionally pre-scaled by `q_scale`.
# ----------------------------------------------------------------------------
def _qkv_kernel(x_ref, w_ref, q_ref, k_ref, v_ref, acc_ref, *,
                dim_head, q_scale, norm_eps):
    kk = pl.program_id(3)

    @pl.when(kk == 0)
    def _():
        acc_ref[...] = jnp.zeros_like(acc_ref)

    # single wide matmul: (tm, tk) x (tk, 3D) -> (tm, 3D), f32 accumulation
    acc_ref[...] += jnp.dot(x_ref[0], w_ref[0],
                            preferred_element_type=jnp.float32)

    @pl.when(kk == pl.num_programs(3) - 1)
    def _():
        a = acc_ref[...]                      # (tm, 3D) f32
        qh = a[:, :dim_head]
        kh = a[:, dim_head:2 * dim_head]
        vh = a[:, 2 * dim_head:]
        q_ref[0, 0] = _scaled_l2norm(qh, q_scale, norm_eps).astype(q_ref.dtype)
        k_ref[0, 0] = _scaled_l2norm(kh, 1.0, norm_eps).astype(k_ref.dtype)
        v_ref[0, 0] = vh.astype(v_ref.dtype)


def qkv_projection(x, w_qkv, *, dim_head, q_scale, seq_tile=256, k_tile=512):
    """x: (B, N, dim) bf16; w_qkv: (H, dim, 3*D) bf16 -> q, k, v (B, H, N, D) bf16."""
    B, N, dim = x.shape
    H = w_qkv.shape[0]
    D = dim_head
    tm = _tile(N, seq_tile)
    tk = _tile(dim, k_tile)
    grid = (B, H, N // tm, dim // tk)
    out_sd = jax.ShapeDtypeStruct((B, H, N, D), jnp.bfloat16)
    kernel = functools.partial(_qkv_kernel, dim_head=D,
                               q_scale=float(q_scale), norm_eps=NORM_EPS)
    return pl.pallas_call(
        kernel,
        out_shape=(out_sd, out_sd, out_sd),
        grid_spec=pltpu.PrefetchScalarGridSpec(
            num_scalar_prefetch=0,
            grid=grid,
            in_specs=[
                pl.BlockSpec((1, tm, tk), lambda b, h, i, kk: (b, i, kk)),
                pl.BlockSpec((1, tk, 3 * D), lambda b, h, i, kk: (h, kk, 0)),
            ],
            out_specs=[
                pl.BlockSpec((1, 1, tm, D), lambda b, h, i, kk: (b, h, i, 0)),
                pl.BlockSpec((1, 1, tm, D), lambda b, h, i, kk: (b, h, i, 0)),
                pl.BlockSpec((1, 1, tm, D), lambda b, h, i, kk: (b, h, i, 0)),
            ],
            scratch_shapes=[
                pltpu.VMEM((tm, 3 * D), jnp.float32),
            ],
        ),
        compiler_params=pltpu.CompilerParams(
            dimension_semantics=("parallel", "parallel", "parallel", "arbitrary"),
            vmem_limit_bytes=VMEM_LIMIT,
        ),
    )(x, w_qkv)


# ----------------------------------------------------------------------------
# Cosine-sim flash-attention kernel: q,k,v (B,H,N,D) bf16 -> o (B,H,N,D) bf16
# q is already l2-normalized AND pre-scaled by `scale`; k is l2-normalized.
# ----------------------------------------------------------------------------
def _attn_kernel(q_ref, k_ref, v_ref, o_ref, acc_ref, rs_ref, *, scale, eps):
    kb = pl.program_id(3)

    @pl.when(kb == 0)
    def _():
        acc_ref[...] = jnp.zeros_like(acc_ref)
        rs_ref[...] = jnp.zeros_like(rs_ref)

    q = q_ref[0, 0]  # (bq, D) bf16, pre-scaled
    k = k_ref[0, 0]  # (bk, D) bf16
    v = v_ref[0, 0]  # (bk, D) bf16

    # logits = q_scaled . k  (== (q . k) * scale); contraction over the last dims
    # of both operands -> no K transpose through the XLU.
    s = lax.dot_general(q, k, (((1,), (1,)), ((), ())),
                        preferred_element_type=jnp.float32)
    e = jnp.exp(s - scale)  # cosine-sim attention: bounded logits, no running max

    # per k-bucket clamp of the row sums, exactly as in the PyTorch reference
    rs_ref[...] += jnp.maximum(jnp.sum(e, axis=-1, keepdims=True), eps)
    acc_ref[...] += lax.dot_general(e.astype(v.dtype), v, (((1,), (0,)), ((), ())),
                                    preferred_element_type=jnp.float32)

    @pl.when(kb == pl.num_programs(3) - 1)
    def _():
        o_ref[0, 0] = (acc_ref[...] *
                       pl.reciprocal(rs_ref[...], approx=True)).astype(o_ref.dtype)


def flash_attention_pallas(q, k, v, scale, q_bucket_size, k_bucket_size):
    """q, k, v: (B, H, N, D) bf16; q pre-scaled by `scale`. Returns (B, H, N, D) bf16."""
    B, H, Nq, D = q.shape
    Nk = k.shape[2]
    bq = min(q_bucket_size, Nq)
    bk = min(k_bucket_size, Nk)
    if Nq % bq:
        bq = Nq  # TODO(synk): ragged q buckets (uneven final split) not handled
    if Nk % bk:
        bk = Nk  # TODO(synk): ragged k buckets not handled (per-bucket clamp boundary)
    grid = (B, H, Nq // bq, Nk // bk)

    kernel = functools.partial(_attn_kernel, scale=float(scale), eps=EPSILON)
    return pl.pallas_call(
        kernel,
        out_shape=jax.ShapeDtypeStruct((B, H, Nq, D), jnp.bfloat16),
        grid_spec=pltpu.PrefetchScalarGridSpec(
            num_scalar_prefetch=0,
            grid=grid,
            in_specs=[
                pl.BlockSpec((1, 1, bq, D), lambda b, h, i, j: (b, h, i, 0)),
                pl.BlockSpec((1, 1, bk, D), lambda b, h, i, j: (b, h, j, 0)),
                pl.BlockSpec((1, 1, bk, D), lambda b, h, i, j: (b, h, j, 0)),
            ],
            out_specs=pl.BlockSpec((1, 1, bq, D), lambda b, h, i, j: (b, h, i, 0)),
            scratch_shapes=[
                pltpu.VMEM((bq, D), jnp.float32),
                pltpu.VMEM((bq, 1), jnp.float32),
            ],
        ),
        compiler_params=pltpu.CompilerParams(
            dimension_semantics=("parallel", "parallel", "parallel", "arbitrary"),
            vmem_limit_bytes=VMEM_LIMIT,
        ),
    )(q, k, v)


# ----------------------------------------------------------------------------
# Output projection kernel: o (B,H,N,D) bf16, wo (H,D,dim) bf16 -> (B,N,dim) f32
# ----------------------------------------------------------------------------
def _out_proj_kernel(o_ref, w_ref, y_ref):
    h = pl.program_id(3)

    @pl.when(h == 0)
    def _():
        y_ref[...] = jnp.zeros_like(y_ref)

    y_ref[0] += jnp.dot(o_ref[0, 0], w_ref[0],
                        preferred_element_type=jnp.float32).astype(y_ref.dtype)


def out_projection(o, wo, *, seq_tile=256, n_tile=512, out_dtype=jnp.float32):
    B, H, N, D = o.shape
    dim = wo.shape[2]
    tm = _tile(N, seq_tile)
    tn = _tile(dim, n_tile)
    grid = (B, N // tm, dim // tn, H)  # head axis last = reduction
    return pl.pallas_call(
        _out_proj_kernel,
        out_shape=jax.ShapeDtypeStruct((B, N, dim), out_dtype),
        grid_spec=pltpu.PrefetchScalarGridSpec(
            num_scalar_prefetch=0,
            grid=grid,
            in_specs=[
                pl.BlockSpec((1, 1, tm, D), lambda b, i, j, h: (b, h, i, 0)),
                pl.BlockSpec((1, D, tn), lambda b, i, j, h: (h, 0, j)),
            ],
            out_specs=pl.BlockSpec((1, tm, tn), lambda b, i, j, h: (b, i, j)),
        ),
        compiler_params=pltpu.CompilerParams(
            dimension_semantics=("parallel", "parallel", "parallel", "arbitrary"),
            vmem_limit_bytes=VMEM_LIMIT,
        ),
    )(o, wo)


# ----------------------------------------------------------------------------
# Module wrapper
# ----------------------------------------------------------------------------
def l2norm(t, eps=NORM_EPS):
    n = jnp.sqrt(jnp.sum(t * t, axis=-1, keepdims=True))
    return t / jnp.maximum(n, eps)


class FlashAttentionJAX:
    def __init__(self, *, dim, scale=16, heads=8, dim_head=64, causal=False,
                 q_bucket_size=512, k_bucket_size=1024, key=None):
        assert not causal, "only the module-default causal=False path is implemented"
        # TODO(synk): causal masking / attention mask / cross-attention context not implemented
        if key is None:
            key = jax.random.PRNGKey(42)
        self.dim = dim
        self.heads = heads
        self.dim_head = dim_head
        self.scale = scale
        self.q_bucket_size = q_bucket_size
        self.k_bucket_size = k_bucket_size
        inner = heads * dim_head

        k1, k2, k3 = jax.random.split(key, 3)
        # f32 master weights, nn.Linear layout (out_features, in_features)
        self.w_q = jax.random.normal(k1, (inner, dim), jnp.float32) * 0.05
        self.w_kv = jax.random.normal(k2, (2 * inner, dim), jnp.float32) * 0.05
        self.w_out = jax.random.normal(k3, (dim, inner), jnp.float32) * 0.05

        # pre-arranged bf16 kernel weights (done once here -> no per-call transposes)
        # combined per-head slab: columns [0:D)=q, [D:2D)=k, [2D:3D)=v
        wq_h = self.w_q.reshape(heads, dim_head, dim)            # (H, D, dim)
        wk_h = self.w_kv[:inner].reshape(heads, dim_head, dim)   # (H, D, dim)
        wv_h = self.w_kv[inner:].reshape(heads, dim_head, dim)   # (H, D, dim)
        w_all = jnp.concatenate([wq_h, wk_h, wv_h], axis=1)      # (H, 3D, dim)
        self.w_qkv = jnp.transpose(w_all, (0, 2, 1)).astype(jnp.bfloat16)  # (H, dim, 3D)
        # (dim, H*D) -> (H*D, dim) -> (H, D, dim)
        self.wo_hdk = self.w_out.T.reshape(heads, dim_head, dim).astype(jnp.bfloat16)

    def __call__(self, x, q_bucket_size=None, k_bucket_size=None):
        qbs = q_bucket_size if q_bucket_size is not None else self.q_bucket_size
        kbs = k_bucket_size if k_bucket_size is not None else self.k_bucket_size

        x_bf = x.astype(jnp.bfloat16)
        # fused QKV projection + l2norm (+ scale folded into q), output in (B, H, N, D)
        q, k, v = qkv_projection(x_bf, self.w_qkv,
                                 dim_head=self.dim_head, q_scale=self.scale)
        o = flash_attention_pallas(q, k, v, self.scale, qbs, kbs)
        out = out_projection(o, self.wo_hdk, out_dtype=jnp.float32)
        return out, None


# ----------------------------------------------------------------------------
# Pure-JAX f32 reference (mirrors the PyTorch forward, incl. per-k-bucket clamp)
# ----------------------------------------------------------------------------
def reference_forward(mod, x):
    b, n, dim = x.shape
    h, d = mod.heads, mod.dim_head
    q = x @ mod.w_q.T
    kv = x @ mod.w_kv.T
    k, v = jnp.split(kv, 2, axis=-1)

    def to_bhnd(t):
        return t.reshape(b, n, h, d).transpose(0, 2, 1, 3)

    q, k, v = map(to_bhnd, (q, k, v))
    q, k = l2norm(q), l2norm(k)

    kb = min(mod.k_bucket_size, n)
    if n % kb:
        kb = n
    acc = jnp.zeros((b, h, n, d), jnp.float32)
    rs = jnp.zeros((b, h, n, 1), jnp.float32)
    for j0 in range(0, n, kb):
        kc = k[:, :, j0:j0 + kb]
        vc = v[:, :, j0:j0 + kb]
        s = jnp.einsum('bhid,bhjd->bhij', q, kc) * mod.scale - mod.scale
        e = jnp.exp(s)
        rs = rs + jnp.maximum(e.sum(-1, keepdims=True), EPSILON)
        acc = acc + jnp.einsum('bhij,bhjd->bhid', e, vc)
    o = acc / rs
    o = o.transpose(0, 2, 1, 3).reshape(b, n, h * d)
    return o @ mod.w_out.T


if __name__ == "__main__":
    B, N, DIM = 2, 256, 128
    HEADS, DIM_HEAD = 2, 64
    # bucket sizes chosen so the multi-block accumulation path is exercised
    Q_BUCKET, K_BUCKET = 128, 128

    x = jax.random.normal(jax.random.PRNGKey(0), (B, N, DIM), jnp.float32)

    mod = FlashAttentionJAX(dim=DIM, scale=16, heads=HEADS, dim_head=DIM_HEAD,
                            causal=False, q_bucket_size=Q_BUCKET,
                            k_bucket_size=K_BUCKET, key=jax.random.PRNGKey(42))

    out, _ = mod(x)
    out = jax.block_until_ready(out)

    ref = jax.block_until_ready(reference_forward(mod, x))
    # bf16 matmuls vs f32 reference -> loosen tolerance accordingly
    if not jnp.allclose(out, ref, atol=3e-2, rtol=3e-2):
        err = float(jnp.max(jnp.abs(out - ref)))
        raise AssertionError(f"Pallas output does not match reference (max abs err {err})")

    print("KERNEL_OK")
</pallas_src>

<mosaic_0001>
module attributes {stable_mosaic.version = 11 : i64} {
  func.func @_qkv_kernel(%arg0: i32, %arg1: i32, %arg2: i32, %arg3: i32, %arg4: memref<1x256x128xbf16, #tpu.memory_space<vmem>>, %arg5: memref<1x128x192xbf16, #tpu.memory_space<vmem>>, %arg6: memref<1x1x256x64xbf16, #tpu.memory_space<vmem>>, %arg7: memref<1x1x256x64xbf16, #tpu.memory_space<vmem>>, %arg8: memref<1x1x256x64xbf16, #tpu.memory_space<vmem>>, %arg9: memref<256x192xf32, #tpu.memory_space<vmem>>) attributes {dimension_semantics = [#tpu.dimension_semantics<parallel>, #tpu.dimension_semantics<parallel>, #tpu.dimension_semantics<parallel>, #tpu.dimension_semantics<arbitrary>], iteration_bounds = array<i64: 2, 2, 1, 1>, scalar_prefetch = 0 : i64, scratch_operands = 1 : i64, tpu.core_type = #tpu.core_type<tc>, window_params = [{transform_indices = @transform_0, window_bounds = array<i64: 1, 256, 128>}, {transform_indices = @transform_1, window_bounds = array<i64: 1, 128, 192>}, {transform_indices = @transform_2, window_bounds = array<i64: 1, 1, 256, 64>}, {transform_indices = @transform_3, window_bounds = array<i64: 1, 1, 256, 64>}, {transform_indices = @transform_4, window_bounds = array<i64: 1, 1, 256, 64>}]} {
    %c0_i32 = arith.constant 0 : i32
    %0 = arith.cmpi eq, %arg3, %c0_i32 : i32
    %1 = arith.extui %0 : i1 to i32
    %c0_i32_0 = arith.constant 0 : i32
    %2 = arith.cmpi ne, %1, %c0_i32_0 : i32
    scf.if %2 {
      %cst_12 = arith.constant 0.000000e+00 : f32
      %14 = vector.broadcast %cst_12 : f32 to vector<256x192xf32>
      %c0_13 = arith.constant 0 : index
      %c0_14 = arith.constant 0 : index
      %15 = vector.load %arg9[%c0_13, %c0_14] : memref<256x192xf32, #tpu.memory_space<vmem>>, vector<256x192xf32>
      tpu.vector_store %arg9[%c0_13, %c0_14], %14 {strides = array<i32>} : memref<256x192xf32, #tpu.memory_space<vmem>>, vector<256x192xf32>,
    } else {
    }
    %c0 = arith.constant 0 : index
    %c0_1 = arith.constant 0 : index
    %3 = vector.load %arg9[%c0, %c0_1] : memref<256x192xf32, #tpu.memory_space<vmem>>, vector<256x192xf32>
    %c0_2 = arith.constant 0 : index
    %c0_3 = arith.constant 0 : index
    %c0_4 = arith.constant 0 : index
    %4 = vector.load %arg4[%c0_2, %c0_3, %c0_4] : memref<1x256x128xbf16, #tpu.memory_space<vmem>>, vector<1x256x128xbf16>
    %5 = vector.shape_cast %4 : vector<1x256x128xbf16> to vector<256x128xbf16>
    %c0_5 = arith.constant 0 : index
    %c0_6 = arith.constant 0 : index
    %c0_7 = arith.constant 0 : index
    %6 = vector.load %arg5[%c0_5, %c0_6, %c0_7] : memref<1x128x192xbf16, #tpu.memory_space<vmem>>, vector<1x128x192xbf16>
    %7 = vector.shape_cast %6 : vector<1x128x192xbf16> to vector<128x192xbf16>
    %cst = arith.constant dense<0.000000e+00> : vector<256x192xf32>
    %8 = tpu.matmul %5, %7, %cst {dimension_numbers = #tpu.dot_dimension_numbers<[1], [0], [0], [1], [0, 0, 1, 1], [], []>} : vector<256x128xbf16>, vector<128x192xbf16>, vector<256x192xf32> -> vector<256x192xf32>
    %9 = arith.addf %3, %8 : vector<256x192xf32>
    %c0_8 = arith.constant 0 : index
    %c0_9 = arith.constant 0 : index
    %10 = vector.load %arg9[%c0_8, %c0_9] : memref<256x192xf32, #tpu.memory_space<vmem>>, vector<256x192xf32>
    tpu.vector_store %arg9[%c0_8, %c0_9], %9 {strides = array<i32>} : memref<256x192xf32, #tpu.memory_space<vmem>>, vector<256x192xf32>,
    %c0_i32_10 = arith.constant 0 : i32
    %11 = arith.cmpi eq, %arg3, %c0_i32_10 : i32
    %12 = arith.extui %11 : i1 to i32
    %c0_i32_11 = arith.constant 0 : i32
    %13 = arith.cmpi ne, %12, %c0_i32_11 : i32
    scf.if %13 {
      %c0_12 = arith.constant 0 : index
      %c0_13 = arith.constant 0 : index
      %14 = vector.load %arg9[%c0_12, %c0_13] : memref<256x192xf32, #tpu.memory_space<vmem>>, vector<256x192xf32>
      %15 = vector.extract_strided_slice %14 {offsets = [0, 0], sizes = [256, 64], strides = [1, 1]} : vector<256x192xf32> to vector<256x64xf32>
      %16 = vector.extract_strided_slice %14 {offsets = [0, 64], sizes = [256, 64], strides = [1, 1]} : vector<256x192xf32> to vector<256x64xf32>
      %17 = vector.extract_strided_slice %14 {offsets = [0, 128], sizes = [256, 64], strides = [1, 1]} : vector<256x192xf32> to vector<256x64xf32>
      %18 = arith.mulf %15, %15 : vector<256x64xf32>
      %cst_14 = arith.constant dense<0.000000e+00> : vector<256xf32>
      %19 = vector.multi_reduction <add>, %18, %cst_14 [1] : vector<256x64xf32> to vector<256xf32>
      %20 = vector.shape_cast %19 : vector<256xf32> to vector<256x1xf32>
      %cst_15 = arith.constant 1.000000e-24 : f32
      %21 = vector.broadcast %cst_15 : f32 to vector<256x1xf32>
      %22 = arith.maximumf %20, %21 : vector<256x1xf32>
      %23 = math.rsqrt %22 : vector<256x1xf32>
      %cst_16 = arith.constant 1.600000e+01 : f32
      %24 = vector.broadcast %cst_16 : f32 to vector<256x1xf32>
      %25 = arith.mulf %23, %24 : vector<256x1xf32>
      %26 = vector.broadcast %25 : vector<256x1xf32> to vector<256x64xf32>
      %27 = arith.mulf %15, %26 : vector<256x64xf32>
      %28 = arith.truncf %27 : vector<256x64xf32> to vector<256x64xbf16>
      %c0_17 = arith.constant 0 : index
      %c0_18 = arith.constant 0 : index
      %c0_19 = arith.constant 0 : index
      %c0_20 = arith.constant 0 : index
      %29 = vector.load %arg6[%c0_17, %c0_18, %c0_19, %c0_20] : memref<1x1x256x64xbf16, #tpu.memory_space<vmem>>, vector<1x1x256x64xbf16>
      %30 = vector.shape_cast %29 : vector<1x1x256x64xbf16> to vector<256x64xbf16>
      %31 = vector.shape_cast %28 : vector<256x64xbf16> to vector<1x1x256x64xbf16>
      tpu.vector_store %arg6[%c0_17, %c0_18, %c0_19, %c0_20], %31 {strides = array<i32>} : memref<1x1x256x64xbf16, #tpu.memory_space<vmem>>, vector<1x1x256x64xbf16>,
      %32 = arith.mulf %16, %16 : vector<256x64xf32>
      %cst_21 = arith.constant dense<0.000000e+00> : vector<256xf32>
      %33 = vector.multi_reduction <add>, %32, %cst_21 [1] : vector<256x64xf32> to vector<256xf32>
      %34 = vector.shape_cast %33 : vector<256xf32> to vector<256x1xf32>
      %cst_22 = arith.constant 1.000000e-24 : f32
      %35 = vector.broadcast %cst_22 : f32 to vector<256x1xf32>
      %36 = arith.maximumf %34, %35 : vector<256x1xf32>
      %37 = math.rsqrt %36 : vector<256x1xf32>
      %cst_23 = arith.constant 1.000000e+00 : f32
      %38 = vector.broadcast %cst_23 : f32 to vector<256x1xf32>
      %39 = arith.mulf %37, %38 : vector<256x1xf32>
      %40 = vector.broadcast %39 : vector<256x1xf32> to vector<256x64xf32>
      %41 = arith.mulf %16, %40 : vector<256x64xf32>
      %42 = arith.truncf %41 : vector<256x64xf32> to vector<256x64xbf16>
      %c0_24 = arith.constant 0 : index
      %c0_25 = arith.constant 0 : index
      %c0_26 = arith.constant 0 : index
      %c0_27 = arith.constant 0 : index
      %43 = vector.load %arg7[%c0_24, %c0_25, %c0_26, %c0_27] : memref<1x1x256x64xbf16, #tpu.memory_space<vmem>>, vector<1x1x256x64xbf16>
      %44 = vector.shape_cast %43 : vector<1x1x256x64xbf16> to vector<256x64xbf16>
      %45 = vector.shape_cast %42 : vector<256x64xbf16> to vector<1x1x256x64xbf16>
      tpu.vector_store %arg7[%c0_24, %c0_25, %c0_26, %c0_27], %45 {strides = array<i32>} : memref<1x1x256x64xbf16, #tpu.memory_space<vmem>>, vector<1x1x256x64xbf16>,
      %46 = arith.truncf %17 : vector<256x64xf32> to vector<256x64xbf16>
      %c0_28 = arith.constant 0 : index
      %c0_29 = arith.constant 0 : index
      %c0_30 = arith.constant 0 : index
      %c0_31 = arith.constant 0 : index
      %47 = vector.load %arg8[%c0_28, %c0_29, %c0_30, %c0_31] : memref<1x1x256x64xbf16, #tpu.memory_space<vmem>>, vector<1x1x256x64xbf16>
      %48 = vector.shape_cast %47 : vector<1x1x256x64xbf16> to vector<256x64xbf16>
      %49 = vector.shape_cast %46 : vector<256x64xbf16> to vector<1x1x256x64xbf16>
      tpu.vector_store %arg8[%c0_28, %c0_29, %c0_30, %c0_31], %49 {strides = array<i32>} : memref<1x1x256x64xbf16, #tpu.memory_space<vmem>>, vector<1x1x256x64xbf16>,
    } else {
    }
    return
  }
  func.func @transform_0(%arg0: i32, %arg1: i32, %arg2: i32, %arg3: i32) -> (i32, i32, i32) {
    %c0_i32 = arith.constant 0 : i32
    return %arg0, %arg2, %arg3 : i32, i32, i32
  }
  func.func @transform_1(%arg0: i32, %arg1: i32, %arg2: i32, %arg3: i32) -> (i32, i32, i32) {
    %c0_i32 = arith.constant 0 : i32
    %c0_i32_0 = arith.constant 0 : i32
    return %arg1, %arg3, %c0_i32 : i32, i32, i32
  }
  func.func @transform_2(%arg0: i32, %arg1: i32, %arg2: i32, %arg3: i32) -> (i32, i32, i32, i32) {
    %c0_i32 = arith.constant 0 : i32
    %c0_i32_0 = arith.constant 0 : i32
    return %arg0, %arg1, %arg2, %c0_i32 : i32, i32, i32, i32
  }
  func.func @transform_3(%arg0: i32, %arg1: i32, %arg2: i32, %arg3: i32) -> (i32, i32, i32, i32) {
    %c0_i32 = arith.constant 0 : i32
    %c0_i32_0 = arith.constant 0 : i32
    return %arg0, %arg1, %arg2, %c0_i32 : i32, i32, i32, i32
  }
  func.func @transform_4(%arg0: i32, %arg1: i32, %arg2: i32, %arg3: i32) -> (i32, i32, i32, i32) {
    %c0_i32 = arith.constant 0 : i32
    %c0_i32_0 = arith.constant 0 : i32
    return %arg0, %arg1, %arg2, %c0_i32 : i32, i32, i32, i32
  }
}

</mosaic_0001>

<llo_original>
// kernel: tpu_custom_call.1
$region0: #{tpu_custom_call.1}
  #allocation0 [shape = 'u32[]', space=smem, size = 0x4, offset = 0x4, fixed_abs, tag = 'smem constant byte address 0x4 - core index']
  #allocation1 [shape = 'u32[144,128]{1,0:T(1,128)}', space=vmem, size = 0x12000, scoped, tag = 'internal scratch']
  #allocation2 [shape = 'f32[256,192]{1,0:T(8,128)}', space=vmem, size = 0x40000, scoped, tag = 'scratch operand']
  %s0 = inlined_call_operand.hbm [shape: bf16[2,256,128], index: 0, kind: input, shape index: {}]
  %s1 = inlined_call_operand.hbm [shape: bf16[2,128,192], index: 1, kind: input, shape index: {}]
  %s2 = inlined_call_operand.hbm [shape: bf16[2,2,256,64], index: 2, kind: output, shape index: {0}]
  %s3 = inlined_call_operand.hbm [shape: bf16[2,2,256,64], index: 3, kind: output, shape index: {1}]
  %s4 = inlined_call_operand.hbm [shape: bf16[2,2,256,64], index: 4, kind: output, shape index: {2}]
  %5 = xla_tuple %s2, %s3, %s4
  %s6 = sld [smem:[#allocation0]]
  $region73: #{tpu_custom_call.1} parent=0
    _
  %s8 = ssub.s32 1, %s6
  %s9 = scalar_select 0, %s8, %s6
  $region1: #{tpu_custom_call.1} parent=0
    #allocation3 [shape = 'u8[131072]{0}', space=vmem, size = 0x20000, scoped, tag = 'input window, operand 0']
    #allocation4 [shape = 's32[2]{0}', space=sflag, size = 0x8, scoped, tag = 'scoped memory for tpu_custom_call.1']
    #allocation5 [shape = 's32[2]{0}', space=sflag, size = 0x8, scoped, tag = 'scoped memory for tpu_custom_call.1']
    #allocation6 [shape = 'u8[131072]{0}', space=vmem, size = 0x20000, scoped, tag = 'input window, operand 1']
    #allocation7 [shape = 's32[2]{0}', space=sflag, size = 0x8, scoped, tag = 'scoped memory for tpu_custom_call.1']
    #allocation8 [shape = 'u8[131072]{0}', space=vmem, size = 0x20000, scoped, tag = 'output window, operand 0']
    #allocation9 [shape = 'u8[131072]{0}', space=vmem, size = 0x20000, scoped, tag = 'output window, operand 1']
    #allocation10 [shape = 's32[2]{0}', space=sflag, size = 0x8, scoped, tag = 'scoped memory for tpu_custom_call.1']
    #allocation11 [shape = 'u8[131072]{0}', space=vmem, size = 0x20000, scoped, tag = 'output window, operand 2']
    %10 = vsyncpa [#allocation4], 0
    %s11 = scalar_lea.sflag [#allocation4], 1
    %12 = vsyncpa %s11, 0
    %13 = vsyncpa [#allocation7], 0
    %s14 = scalar_lea.sflag [#allocation7], 1
    %15 = vsyncpa %s14, 0
    %16 = vsyncpa [#allocation5], 0
    %s17 = scalar_lea.sflag [#allocation5], 1
    %18 = vsyncpa %s17, 0
    %19 = vsyncpa [#allocation10], 0
    %s20 = scalar_lea.sflag [#allocation10], 1
    %21 = vsyncpa %s20, 0
    loop: start=0, step=1, limit=6
    $region2: #{tpu_custom_call.1} parent=1 // loop_pre_header
      _
    $region3: #{tpu_custom_call.1} parent=1 // loop_header
      %s23 = sphi 0, %s27
      %p24 = scmp.ge.s32.totalorder %s23, 6
      %s30 = sphi 0, %s56
      %s31 = sphi 0, %s52
      %s32 = sphi 0, %s48
      %s33 = sphi 0, %s44
      %s34 = sphi 0, %s30
      %s35 = sphi 0, %s31
      %s36 = sphi 0, %s32
      %s37 = sphi 0, %s33
      %s38 = sphi 0, %s34
      %s39 = sphi 0, %s35
      %s40 = sphi 0, %s36
      %s41 = sphi 0, %s37
      %s63 = sphi 0, %s65
      %s66 = sphi 0, %s63
      %s67 = sphi 0, %s66
      %s83 = sphi 0, %s67
      %s91 = sphi 0, %s93
      %s94 = sphi 0, %s91
      %s95 = sphi 0, %s94
      %s111 = sphi 0, %s95
      %s121 = sphi 0, %s123
      %s124 = sphi 0, %s121
      %s125 = sphi 0, %s124
      %s141 = sphi 0, %s125
      %s151 = sphi 0, %s153
      %s154 = sphi 0, %s151
      %s155 = sphi 0, %s154
      %s171 = sphi 0, %s155
      %s181 = sphi 0, %s183
      %s184 = sphi 0, %s181
      %s185 = sphi 0, %s184
      %s201 = sphi 0, %s185
    $region4: #{tpu_custom_call.1} parent=1 // loop_header_branch
      %26 = sbr.rel (%p24) target = $region8
    $region5: #{tpu_custom_call.1} parent=1 // loop_body
      %s28 = ssub.s32 %s23, 1
      %s29 = ssub.s32 %s23, 2
      %s42 = sadd.s32 1, %s33
      %p43 = scmp.ge.s32.totalorder %s42, 1
      %s44 = scalar_select %p43, 0, %s42
      %s45 = sadd.s32 1, %s32
      %s46 = scalar_select %p43, %s45, %s32
      %p47 = scmp.ge.s32.totalorder %s46, 1
      %s48 = scalar_select %p47, 0, %s46
      %s49 = sadd.s32 1, %s31
      %s50 = scalar_select %p47, %s49, %s31
      %p51 = scmp.ge.s32.totalorder %s50, 2
      %s52 = scalar_select %p51, 0, %s50
      %s53 = sadd.s32 1, %s30
      %s54 = scalar_select %p51, %s53, %s30
      %p55 = scmp.ge.s32.totalorder %s54, 2
      %s56 = scalar_select %p55, 0, %s54
      %s57 = ssub.s32 %s30, %s56
      %s58 = ssub.s32 %s32, %s48
      %s59 = sor.u32 %s57, %s58
      %s60 = ssub.s32 %s33, %s44
      %s61 = sor.u32 %s59, %s60
      %p62 = scmp.eq.s32.totalorder %s61, 0
      %s64 = sadd.s32 %s63, 1
      %s65 = scalar_select %p62, %s63, %s64
      %p68 = pneg %p62
      %p69 = scmp.eq.s32.totalorder %s23, 3
      %p70 = por %p68, %p69
      %p71 = scmp.ne.s32.totalorder %s63, %s66
      %p72 = scmp.eq.s32.totalorder %s23, 0
      %p73 = por %p71, %p72
      %p74 = scmp.ne.s32.totalorder %s63, %s66
      %p75 = scmp.eq.s32.totalorder %s28, 3
      %p76 = por %p74, %p75
      %p77 = scmp.ne.s32.totalorder %s66, %s67
      %p78 = scmp.eq.s32.totalorder %s28, 0
      %p79 = por %p77, %p78
      %p80 = scmp.ne.s32.totalorder %s66, %s67
      %p81 = scmp.eq.s32.totalorder %s29, 3
      %p82 = por %p80, %p81
      %p84 = scmp.ne.s32.totalorder %s67, %s83
      %p85 = scmp.eq.s32.totalorder %s29, 0
      %p86 = por %p84, %p85
      %s87 = ssub.s32 %s31, %s52
      %s88 = ssub.s32 %s33, %s44
      %s89 = sor.u32 %s87, %s88
      %p90 = scmp.eq.s32.totalorder %s89, 0
      %s92 = sadd.s32 %s91, 1
      %s93 = scalar_select %p90, %s91, %s92
      %p96 = pneg %p90
      %p97 = scmp.eq.s32.totalorder %s23, 3
      %p98 = por %p96, %p97
      %p99 = scmp.ne.s32.totalorder %s91, %s94
      %p100 = scmp.eq.s32.totalorder %s23, 0
      %p101 = por %p99, %p100
      %p102 = scmp.ne.s32.totalorder %s91, %s94
      %p103 = scmp.eq.s32.totalorder %s28, 3
      %p104 = por %p102, %p103
      %p105 = scmp.ne.s32.totalorder %s94, %s95
      %p106 = scmp.eq.s32.totalorder %s28, 0
      %p107 = por %p105, %p106
      %p108 = scmp.ne.s32.totalorder %s94, %s95
      %p109 = scmp.eq.s32.totalorder %s29, 3
      %p110 = por %p108, %p109
      %p112 = scmp.ne.s32.totalorder %s95, %s111
      %p113 = scmp.eq.s32.totalorder %s29, 0
      %p114 = por %p112, %p113
      %s115 = ssub.s32 %s30, %s56
      %s116 = ssub.s32 %s31, %s52
      %s117 = sor.u32 %s115, %s116
      %s118 = ssub.s32 %s32, %s48
      %s119 = sor.u32 %s117, %s118
      %p120 = scmp.eq.s32.totalorder %s119, 0
      %s122 = sadd.s32 %s121, 1
      %s123 = scalar_select %p120, %s121, %s122
      %p126 = pneg %p120
      %p127 = scmp.eq.s32.totalorder %s23, 3
      %p128 = por %p126, %p127
      %p129 = scmp.ne.s32.totalorder %s121, %s124
      %p130 = scmp.eq.s32.totalorder %s23, 0
      %p131 = por %p129, %p130
      %p132 = scmp.ne.s32.totalorder %s121, %s124
      %p133 = scmp.eq.s32.totalorder %s28, 3
      %p134 = por %p132, %p133
      %p135 = scmp.ne.s32.totalorder %s124, %s125
      %p136 = scmp.eq.s32.totalorder %s28, 0
      %p137 = por %p135, %p136
      %p138 = scmp.ne.s32.totalorder %s124, %s125
      %p139 = scmp.eq.s32.totalorder %s29, 3
      %p140 = por %p138, %p139
      %p142 = scmp.ne.s32.totalorder %s125, %s141
      %p143 = scmp.eq.s32.totalorder %s29, 0
      %p144 = por %p142, %p143
      %s145 = ssub.s32 %s30, %s56
      %s146 = ssub.s32 %s31, %s52
      %s147 = sor.u32 %s145, %s146
      %s148 = ssub.s32 %s32, %s48
      %s149 = sor.u32 %s147, %s148
      %p150 = scmp.eq.s32.totalorder %s149, 0
      %s152 = sadd.s32 %s151, 1
      %s153 = scalar_select %p150, %s151, %s152
      %p156 = pneg %p150
      %p157 = scmp.eq.s32.totalorder %s23, 3
      %p158 = por %p156, %p157
      %p159 = scmp.ne.s32.totalorder %s151, %s154
      %p160 = scmp.eq.s32.totalorder %s23, 0
      %p161 = por %p159, %p160
      %p162 = scmp.ne.s32.totalorder %s151, %s154
      %p163 = scmp.eq.s32.totalorder %s28, 3
      %p164 = por %p162, %p163
      %p165 = scmp.ne.s32.totalorder %s154, %s155
      %p166 = scmp.eq.s32.totalorder %s28, 0
      %p167 = por %p165, %p166
      %p168 = scmp.ne.s32.totalorder %s154, %s155
      %p169 = scmp.eq.s32.totalorder %s29, 3
      %p170 = por %p168, %p169
      %p172 = scmp.ne.s32.totalorder %s155, %s171
      %p173 = scmp.eq.s32.totalorder %s29, 0
      %p174 = por %p172, %p173
      %s175 = ssub.s32 %s30, %s56
      %s176 = ssub.s32 %s31, %s52
      %s177 = sor.u32 %s175, %s176
      %s178 = ssub.s32 %s32, %s48
      %s179 = sor.u32 %s177, %s178
      %p180 = scmp.eq.s32.totalorder %s179, 0
      %s182 = sadd.s32 %s181, 1
      %s183 = scalar_select %p180, %s181, %s182
      %p186 = pneg %p180
      %p187 = scmp.eq.s32.totalorder %s23, 3
      %p188 = por %p186, %p187
      %p189 = scmp.ne.s32.totalorder %s181, %s184
      %p190 = scmp.eq.s32.totalorder %s23, 0
      %p191 = por %p189, %p190
      %p192 = scmp.ne.s32.totalorder %s181, %s184
      %p193 = scmp.eq.s32.totalorder %s28, 3
      %p194 = por %p192, %p193
      %p195 = scmp.ne.s32.totalorder %s184, %s185
      %p196 = scmp.eq.s32.totalorder %s28, 0
      %p197 = por %p195, %p196
      %p198 = scmp.ne.s32.totalorder %s184, %s185
      %p199 = scmp.eq.s32.totalorder %s29, 3
      %p200 = por %p198, %p199
      %p202 = scmp.ne.s32.totalorder %s185, %s201
      %p203 = scmp.eq.s32.totalorder %s29, 0
      %p204 = por %p202, %p203
      %p205 = scmp.le.s32.totalorder 1, %s23
      %p206 = scmp.lt.s32.totalorder %s23, 5
      %p207 = pnand %p205, %p206
      %p208 = pneg %p207
      // Predicated region
      $region9: #{tpu_custom_call.1} parent=5 // pred_check
        _
      $region10: #{tpu_custom_call.1} parent=5 // pred_check_branch
        %210 = sbr.rel (%p207) target = $region12
      $region11: #{tpu_custom_call.1} parent=5 // pred_region
        %s211 = ssub.s32 %s23, 1
      $region12: #{tpu_custom_call.1} parent=5 // pred_fallthru
        _
      %p212 = scmp.lt.s32.totalorder %s23, 4
      // Predicated region
      $region13: #{tpu_custom_call.1} parent=5 // pred_check
        %p213 = pneg %p212
      $region14: #{tpu_custom_call.1} parent=5 // pred_check_branch
        %215 = sbr.rel (%p213) target = $region16
      $region15: #{tpu_custom_call.1} parent=5 // pred_region
        // Predicated region
        $region17: #{tpu_custom_call.1} parent=15 // pred_check
          %p216 = pneg %p73
        $region18: #{tpu_custom_call.1} parent=15 // pred_check_branch
          %218 = sbr.rel (%p216) target = $region20
        $region19: #{tpu_custom_call.1} parent=15 // pred_region
          %s219 = sand.u32 %s63, 1
          %s220 = scalar_lea.sflag [#allocation4], %s219
          %s221 = sand.u32 %s63, 1
          %s222 = smul.addr %s221, 128
          %s223 = scalar_lea.vmem [#allocation3], %s222
          %s224 = smul.u32 32, %s32
          %s226 = ssub.s32 2048, 2048
          %227 = vsyncadd %s220, %s226
          %s228 = sadd.s32 %s33, %s224
          %s229 = smul.addr %s30, 32
          %s230 = sadd.s32 %s228, %s229
          %s231 = smul.addr %s230, 64
          %s232 = scalar_lea.hbm %s0, %s231
          %s233 = sshll.u32 %s223, 4
          %s234 = int_to_ptr.vmem [resolvable:$true] %s233
          %239 = dma.hbm_to_vmem [thread:$0]  %s232, 2048, %s234, %s220, 64, 64, 4
        $region20: #{tpu_custom_call.1} parent=15 // pred_fallthru
          _
        // Predicated region
        $region21: #{tpu_custom_call.1} parent=15 // pred_check
          %p240 = pneg %p101
        $region22: #{tpu_custom_call.1} parent=15 // pred_check_branch
          %242 = sbr.rel (%p240) target = $region24
        $region23: #{tpu_custom_call.1} parent=15 // pred_region
          %s243 = sand.u32 %s91, 1
          %s244 = scalar_lea.sflag [#allocation7], %s243
          %s245 = sand.u32 %s91, 1
          %s246 = smul.addr %s245, 128
          %s247 = scalar_lea.vmem [#allocation6], %s246
          %s248 = smul.u32 16, %s33
          %s250 = ssub.s32 2048, 2048
          %251 = vsyncadd %s244, %s250
          %s252 = smul.addr %s248, 2
          %s253 = smul.addr %s31, 32
          %s254 = sadd.s32 %s252, %s253
          %s255 = smul.addr %s254, 64
          %s256 = scalar_lea.hbm %s1, %s255
          %s257 = sshll.u32 %s247, 4
          %s258 = int_to_ptr.vmem [resolvable:$true] %s257
          %263 = dma.hbm_to_vmem [thread:$0]  %s256, 2048, %s258, %s244, 128, 128, 8
        $region24: #{tpu_custom_call.1} parent=15 // pred_fallthru
          _
      $region16: #{tpu_custom_call.1} parent=5 // pred_fallthru
        _
      %p264 = scmp.le.s32.totalorder 1, %s23
      %p265 = scmp.lt.s32.totalorder %s23, 5
      %p266 = pnand %p264, %p265
      %p267 = pneg %p266
      // Predicated region
      $region25: #{tpu_custom_call.1} parent=5 // pred_check
        _
      $region26: #{tpu_custom_call.1} parent=5 // pred_check_branch
        %269 = sbr.rel (%p266) target = $region28
      $region27: #{tpu_custom_call.1} parent=5 // pred_region
        %s270 = ssub.s32 %s23, 1
        %s271 = sand.u32 %s66, 1
        %s272 = scalar_lea.sflag [#allocation4], %s271
        %s273 = sand.u32 %s66, 1
        %s274 = smul.addr %s273, 128
        %s275 = scalar_lea.vmem [#allocation3], %s274
        // Predicated region
        $region29: #{tpu_custom_call.1} parent=27 // pred_check
          %p276 = pneg %p79
        $region30: #{tpu_custom_call.1} parent=27 // pred_check_branch
          %278 = sbr.rel (%p276) target = $region32
        $region31: #{tpu_custom_call.1} parent=27 // pred_region
          %279 = dma.done %s272, 2048
        $region32: #{tpu_custom_call.1} parent=27 // pred_fallthru
          _
        %s280 = sand.u32 %s94, 1
        %s281 = scalar_lea.sflag [#allocation7], %s280
        %s282 = sand.u32 %s94, 1
        %s283 = smul.addr %s282, 128
        %s284 = scalar_lea.vmem [#allocation6], %s283
        // Predicated region
        $region33: #{tpu_custom_call.1} parent=27 // pred_check
          %p285 = pneg %p107
        $region34: #{tpu_custom_call.1} parent=27 // pred_check_branch
          %287 = sbr.rel (%p285) target = $region36
        $region35: #{tpu_custom_call.1} parent=27 // pred_region
          %288 = dma.done %s281, 2048
        $region36: #{tpu_custom_call.1} parent=27 // pred_fallthru
          _
        %s289 = sand.u32 %s66, 1
        %s290 = scalar_lea.sflag [#allocation4], %s289
        %s291 = sand.u32 %s66, 1
        %s292 = smul.addr %s291, 128
        %s293 = scalar_lea.vmem [#allocation3], %s292
        %p294 = pneg %p79
        %p295 = pneg %p76
        %s296 = sand.u32 %s94, 1
        %s297 = scalar_lea.sflag [#allocation7], %s296
        %s298 = sand.u32 %s94, 1
        %s299 = smul.addr %s298, 128
        %s300 = scalar_lea.vmem [#allocation6], %s299
        %p301 = pneg %p107
        %p302 = pneg %p104
        %p303 = pneg %p137
        %p304 = pneg %p134
        %s305 = sand.u32 %s124, 1
        %s306 = scalar_lea.sflag [#allocation5], %s305
        %s307 = sand.u32 %s124, 1
        %s308 = smul.addr %s307, 128
        %s309 = scalar_lea.vmem [#allocation8], %s308
        %p310 = pneg %p167
        %p311 = pneg %p164
        %s312 = sand.u32 %s28, 1
        %s313 = scalar_lea.sflag [#allocation10], %s312
        %s314 = sand.u32 %s154, 1
        %s315 = smul.addr %s314, 128
        %s316 = scalar_lea.vmem [#allocation9], %s315
        %p317 = pneg %p197
        %p318 = pneg %p194
        %s319 = sand.u32 %s28, 1
        %s320 = scalar_lea.sflag [#allocation10], %s319
        %s321 = sand.u32 %s184, 1
        %s322 = smul.addr %s321, 128
        %s323 = scalar_lea.vmem [#allocation11], %s322
        %s324 = smul.u32 32, %s36
        %s325 = smul.u32 16, %s37
        %s326 = smul.u32 32, %s36
        %s327 = smul.u32 32, %s36
        %s328 = smul.u32 32, %s36
        %p330 = scmp.eq.s32.totalorder %s37, 0
        // Predicated region
        $region37: #{tpu_custom_call.1} parent=27 // pred_check
          %p331 = pneg %p330
        $region38: #{tpu_custom_call.1} parent=27 // pred_check_branch
          %333 = sbr.rel (%p331) target = $region40
        $region39: #{tpu_custom_call.1} parent=27 // pred_region
          %334 = vst [vmem:[#allocation2] sm:$0xff] 0.0
          %vm335 = vcmask 523264
          %336 = vst.msk [vmem:[#allocation2 + $0x8] sm:$0xff] %vm335, 0.0
          %337 = vst [vmem:[#allocation2 + $0x10] sm:$0xff] 0.0
          %338 = vst.msk [vmem:[#allocation2 + $0x18] sm:$0xff] %vm335, 0.0
          %339 = vst [vmem:[#allocation2 + $0x20] sm:$0xff] 0.0
          %340 = vst.msk [vmem:[#allocation2 + $0x28] sm:$0xff] %vm335, 0.0
          %341 = vst [vmem:[#allocation2 + $0x30] sm:$0xff] 0.0
          %342 = vst.msk [vmem:[#allocation2 + $0x38] sm:$0xff] %vm335, 0.0
          %343 = vst [vmem:[#allocation2 + $0x40] sm:$0xff] 0.0
          %344 = vst.msk [vmem:[#allocation2 + $0x48] sm:$0xff] %vm335, 0.0
          %345 = vst [vmem:[#allocation2 + $0x50] sm:$0xff] 0.0
          %346 = vst.msk [vmem:[#allocation2 + $0x58] sm:$0xff] %vm335, 0.0
          %347 = vst [vmem:[#allocation2 + $0x60] sm:$0xff] 0.0
          %348 = vst.msk [vmem:[#allocation2 + $0x68] sm:$0xff] %vm335, 0.0
          %349 = vst [vmem:[#allocation2 + $0x70] sm:$0xff] 0.0
          %350 = vst.msk [vmem:[#allocation2 + $0x78] sm:$0xff] %vm335, 0.0
          %351 = vst [vmem:[#allocation2 + $0x80] sm:$0xff] 0.0
          %352 = vst.msk [vmem:[#allocation2 + $0x88] sm:$0xff] %vm335, 0.0
          %353 = vst [vmem:[#allocation2 + $0x90] sm:$0xff] 0.0
          %354 = vst.msk [vmem:[#allocation2 + $0x98] sm:$0xff] %vm335, 0.0
          %355 = vst [vmem:[#allocation2 + $0xa0] sm:$0xff] 0.0
          %356 = vst.msk [vmem:[#allocation2 + $0xa8] sm:$0xff] %vm335, 0.0
          %357 = vst [vmem:[#allocation2 + $0xb0] sm:$0xff] 0.0
          %358 = vst.msk [vmem:[#allocation2 + $0xb8] sm:$0xff] %vm335, 0.0
          %359 = vst [vmem:[#allocation2 + $0xc0] sm:$0xff] 0.0
          %360 = vst.msk [vmem:[#allocation2 + $0xc8] sm:$0xff] %vm335, 0.0
          %361 = vst [vmem:[#allocation2 + $0xd0] sm:$0xff] 0.0
          %362 = vst.msk [vmem:[#allocation2 + $0xd8] sm:$0xff] %vm335, 0.0
          %363 = vst [vmem:[#allocation2 + $0xe0] sm:$0xff] 0.0
          %364 = vst.msk [vmem:[#allocation2 + $0xe8] sm:$0xff] %vm335, 0.0
          %365 = vst [vmem:[#allocation2 + $0xf0] sm:$0xff] 0.0
          %366 = vst.msk [vmem:[#allocation2 + $0xf8] sm:$0xff] %vm335, 0.0
          %367 = vst [vmem:[#allocation2 + $0x100] sm:$0xff] 0.0
          %368 = vst.msk [vmem:[#allocation2 + $0x108] sm:$0xff] %vm335, 0.0
          %369 = vst [vmem:[#allocation2 + $0x110] sm:$0xff] 0.0
          %370 = vst.msk [vmem:[#allocation2 + $0x118] sm:$0xff] %vm335, 0.0
          %371 = vst [vmem:[#allocation2 + $0x120] sm:$0xff] 0.0
          %372 = vst.msk [vmem:[#allocation2 + $0x128] sm:$0xff] %vm335, 0.0
          %373 = vst [vmem:[#allocation2 + $0x130] sm:$0xff] 0.0
          %374 = vst.msk [vmem:[#allocation2 + $0x138] sm:$0xff] %vm335, 0.0
          %375 = vst [vmem:[#allocation2 + $0x140] sm:$0xff] 0.0
          %376 = vst.msk [vmem:[#allocation2 + $0x148] sm:$0xff] %vm335, 0.0
          %377 = vst [vmem:[#allocation2 + $0x150] sm:$0xff] 0.0
          %378 = vst.msk [vmem:[#allocation2 + $0x158] sm:$0xff] %vm335, 0.0
          %379 = vst [vmem:[#allocation2 + $0x160] sm:$0xff] 0.0
          %380 = vst.msk [vmem:[#allocation2 + $0x168] sm:$0xff] %vm335, 0.0
          %381 = vst [vmem:[#allocation2 + $0x170] sm:$0xff] 0.0
          %382 = vst.msk [vmem:[#allocation2 + $0x178] sm:$0xff] %vm335, 0.0
          %383 = vst [vmem:[#allocation2 + $0x180] sm:$0xff] 0.0
          %384 = vst.msk [vmem:[#allocation2 + $0x188] sm:$0xff] %vm335, 0.0
          %385 = vst [vmem:[#allocation2 + $0x190] sm:$0xff] 0.0
          %386 = vst.msk [vmem:[#allocation2 + $0x198] sm:$0xff] %vm335, 0.0
          %387 = vst [vmem:[#allocation2 + $0x1a0] sm:$0xff] 0.0
          %388 = vst.msk [vmem:[#allocation2 + $0x1a8] sm:$0xff] %vm335, 0.0
          %389 = vst [vmem:[#allocation2 + $0x1b0] sm:$0xff] 0.0
          %390 = vst.msk [vmem:[#allocation2 + $0x1b8] sm:$0xff] %vm335, 0.0
          %391 = vst [vmem:[#allocation2 + $0x1c0] sm:$0xff] 0.0
          %392 = vst.msk [vmem:[#allocation2 + $0x1c8] sm:$0xff] %vm335, 0.0
          %393 = vst [vmem:[#allocation2 + $0x1d0] sm:$0xff] 0.0
          %394 = vst.msk [vmem:[#allocation2 + $0x1d8] sm:$0xff] %vm335, 0.0
          %395 = vst [vmem:[#allocation2 + $0x1e0] sm:$0xff] 0.0
          %396 = vst.msk [vmem:[#allocation2 + $0x1e8] sm:$0xff] %vm335, 0.0
          %397 = vst [vmem:[#allocation2 + $0x1f0] sm:$0xff] 0.0
          %398 = vst.msk [vmem:[#allocation2 + $0x1f8] sm:$0xff] %vm335, 0.0
        $region40: #{tpu_custom_call.1} parent=27 // pred_fallthru
          _
        %v399 = vld [vmem:[#allocation2] sm:$0xff]
        %v400 = vld [vmem:[#allocation2 + $0x8] sm:$0xff]
        %v401 = vld [vmem:[#allocation2 + $0x10] sm:$0xff]
        %v402 = vld [vmem:[#allocation2 + $0x18] sm:$0xff]
        %v403 = vld [vmem:[#allocation2 + $0x20] sm:$0xff]
        %v404 = vld [vmem:[#allocation2 + $0x28] sm:$0xff]
        %v405 = vld [vmem:[#allocation2 + $0x30] sm:$0xff]
        %v406 = vld [vmem:[#allocation2 + $0x38] sm:$0xff]
        %v407 = vld [vmem:[#allocation2 + $0x40] sm:$0xff]
        %v408 = vld [vmem:[#allocation2 + $0x48] sm:$0xff]
        %v409 = vld [vmem:[#allocation2 + $0x50] sm:$0xff]
        %v410 = vld [vmem:[#allocation2 + $0x58] sm:$0xff]
        %v411 = vld [vmem:[#allocation2 + $0x60] sm:$0xff]
        %v412 = vld [vmem:[#allocation2 + $0x68] sm:$0xff]
        %v413 = vld [vmem:[#allocation2 + $0x70] sm:$0xff]
        %v414 = vld [vmem:[#allocation2 + $0x78] sm:$0xff]
        %v415 = vld [vmem:[#allocation2 + $0x80] sm:$0xff]
        %v416 = vld [vmem:[#allocation2 + $0x88] sm:$0xff]
        %v417 = vld [vmem:[#allocation2 + $0x90] sm:$0xff]
        %v418 = vld [vmem:[#allocation2 + $0x98] sm:$0xff]
        %v419 = vld [vmem:[#allocation2 + $0xa0] sm:$0xff]
        %v420 = vld [vmem:[#allocation2 + $0xa8] sm:$0xff]
        %v421 = vld [vmem:[#allocation2 + $0xb0] sm:$0xff]
        %v422 = vld [vmem:[#allocation2 + $0xb8] sm:$0xff]
        %v423 = vld [vmem:[#allocation2 + $0xc0] sm:$0xff]
        %v424 = vld [vmem:[#allocation2 + $0xc8] sm:$0xff]
        %v425 = vld [vmem:[#allocation2 + $0xd0] sm:$0xff]
        %v426 = vld [vmem:[#allocation2 + $0xd8] sm:$0xff]
        %v427 = vld [vmem:[#allocation2 + $0xe0] sm:$0xff]
        %v428 = vld [vmem:[#allocation2 + $0xe8] sm:$0xff]
        %v429 = vld [vmem:[#allocation2 + $0xf0] sm:$0xff]
        %v430 = vld [vmem:[#allocation2 + $0xf8] sm:$0xff]
        %v431 = vld [vmem:[#allocation2 + $0x100] sm:$0xff]
        %v432 = vld [vmem:[#allocation2 + $0x108] sm:$0xff]
        %v433 = vld [vmem:[#allocation2 + $0x110] sm:$0xff]
        %v434 = vld [vmem:[#allocation2 + $0x118] sm:$0xff]
        %v435 = vld [vmem:[#allocation2 + $0x120] sm:$0xff]
        %v436 = vld [vmem:[#allocation2 + $0x128] sm:$0xff]
        %v437 = vld [vmem:[#allocation2 + $0x130] sm:$0xff]
        %v438 = vld [vmem:[#allocation2 + $0x138] sm:$0xff]
        %v439 = vld [vmem:[#allocation2 + $0x140] sm:$0xff]
        %v440 = vld [vmem:[#allocation2 + $0x148] sm:$0xff]
        %v441 = vld [vmem:[#allocation2 + $0x150] sm:$0xff]
        %v442 = vld [vmem:[#allocation2 + $0x158] sm:$0xff]
        %v443 = vld [vmem:[#allocation2 + $0x160] sm:$0xff]
        %v444 = vld [vmem:[#allocation2 + $0x168] sm:$0xff]
        %v445 = vld [vmem:[#allocation2 + $0x170] sm:$0xff]
        %v446 = vld [vmem:[#allocation2 + $0x178] sm:$0xff]
        %v447 = vld [vmem:[#allocation2 + $0x180] sm:$0xff]
        %v448 = vld [vmem:[#allocation2 + $0x188] sm:$0xff]
        %v449 = vld [vmem:[#allocation2 + $0x190] sm:$0xff]
        %v450 = vld [vmem:[#allocation2 + $0x198] sm:$0xff]
        %v451 = vld [vmem:[#allocation2 + $0x1a0] sm:$0xff]
        %v452 = vld [vmem:[#allocation2 + $0x1a8] sm:$0xff]
        %v453 = vld [vmem:[#allocation2 + $0x1b0] sm:$0xff]
        %v454 = vld [vmem:[#allocation2 + $0x1b8] sm:$0xff]
        %v455 = vld [vmem:[#allocation2 + $0x1c0] sm:$0xff]
        %v456 = vld [vmem:[#allocation2 + $0x1c8] sm:$0xff]
        %v457 = vld [vmem:[#allocation2 + $0x1d0] sm:$0xff]
        %v458 = vld [vmem:[#allocation2 + $0x1d8] sm:$0xff]
        %v459 = vld [vmem:[#allocation2 + $0x1e0] sm:$0xff]
        %v460 = vld [vmem:[#allocation2 + $0x1e8] sm:$0xff]
        %v461 = vld [vmem:[#allocation2 + $0x1f0] sm:$0xff]
        %v462 = vld [vmem:[#allocation2 + $0x1f8] sm:$0xff]
        %v463 = vld [vmem:[%s275] sm:$0xf]
        %v464 = vld [vmem:[%s275 + $0x4] sm:$0xf]
        %v465 = vld [vmem:[%s275 + $0x8] sm:$0xf]
        %v466 = vld [vmem:[%s275 + $0xc] sm:$0xf]
        %v467 = vld [vmem:[%s275 + $0x10] sm:$0xf]
        %v468 = vld [vmem:[%s275 + $0x14] sm:$0xf]
        %v469 = vld [vmem:[%s275 + $0x18] sm:$0xf]
        %v470 = vld [vmem:[%s275 + $0x1c] sm:$0xf]
        %v471 = vld [vmem:[%s275 + $0x20] sm:$0xf]
        %v472 = vld [vmem:[%s275 + $0x24] sm:$0xf]
        %v473 = vld [vmem:[%s275 + $0x28] sm:$0xf]
        %v474 = vld [vmem:[%s275 + $0x2c] sm:$0xf]
        %v475 = vld [vmem:[%s275 + $0x30] sm:$0xf]
        %v476 = vld [vmem:[%s275 + $0x34] sm:$0xf]
        %v477 = vld [vmem:[%s275 + $0x38] sm:$0xf]
        %v478 = vld [vmem:[%s275 + $0x3c] sm:$0xf]
        %v479 = vld [vmem:[%s275 + $0x40] sm:$0xf]
        %v480 = vld [vmem:[%s275 + $0x44] sm:$0xf]
        %v481 = vld [vmem:[%s275 + $0x48] sm:$0xf]
        %v482 = vld [vmem:[%s275 + $0x4c] sm:$0xf]
        %v483 = vld [vmem:[%s275 + $0x50] sm:$0xf]
        %v484 = vld [vmem:[%s275 + $0x54] sm:$0xf]
        %v485 = vld [vmem:[%s275 + $0x58] sm:$0xf]
        %v486 = vld [vmem:[%s275 + $0x5c] sm:$0xf]
        %v487 = vld [vmem:[%s275 + $0x60] sm:$0xf]
        %v488 = vld [vmem:[%s275 + $0x64] sm:$0xf]
        %v489 = vld [vmem:[%s275 + $0x68] sm:$0xf]
        %v490 = vld [vmem:[%s275 + $0x6c] sm:$0xf]
        %v491 = vld [vmem:[%s275 + $0x70] sm:$0xf]
        %v492 = vld [vmem:[%s275 + $0x74] sm:$0xf]
        %v493 = vld [vmem:[%s275 + $0x78] sm:$0xf]
        %v494 = vld [vmem:[%s275 + $0x7c] sm:$0xf]
        %v495 = vld [vmem:[%s284] sm:$0xff]
        %v496 = vld [vmem:[%s284 + $0x8] sm:$0xff]
        %v497 = vld [vmem:[%s284 + $0x10] sm:$0xff]
        %v498 = vld [vmem:[%s284 + $0x18] sm:$0xff]
        %v499 = vld [vmem:[%s284 + $0x20] sm:$0xff]
        %v500 = vld [vmem:[%s284 + $0x28] sm:$0xff]
        %v501 = vld [vmem:[%s284 + $0x30] sm:$0xff]
        %v502 = vld [vmem:[%s284 + $0x38] sm:$0xff]
        %v503 = vld [vmem:[%s284 + $0x40] sm:$0xff]
        %v504 = vld [vmem:[%s284 + $0x48] sm:$0xff]
        %v505 = vld [vmem:[%s284 + $0x50] sm:$0xff]
        %v506 = vld [vmem:[%s284 + $0x58] sm:$0xff]
        %v507 = vld [vmem:[%s284 + $0x60] sm:$0xff]
        %v508 = vld [vmem:[%s284 + $0x68] sm:$0xff]
        %v509 = vld [vmem:[%s284 + $0x70] sm:$0xff]
        %v510 = vld [vmem:[%s284 + $0x78] sm:$0xff]
        %v543 = vunpack.c.l.b16 %v463
        %v544 = vunpack.c.l.b16 %v464
        %v545 = vunpack.c.l.b16 %v465
        %v546 = vunpack.c.l.b16 %v466
        %v547 = vunpack.c.l.b16 %v467
        %v548 = vunpack.c.l.b16 %v468
        %v549 = vunpack.c.l.b16 %v469
        %v550 = vunpack.c.l.b16 %v470
        %v551 = vunpack.c.l.b16 %v471
        %v552 = vunpack.c.l.b16 %v472
        %v553 = vunpack.c.l.b16 %v473
        %v554 = vunpack.c.l.b16 %v474
        %v555 = vunpack.c.l.b16 %v475
        %v556 = vunpack.c.l.b16 %v476
        %v557 = vunpack.c.l.b16 %v477
        %v558 = vunpack.c.l.b16 %v478
        %v559 = vunpack.c.l.b16 %v479
        %v560 = vunpack.c.l.b16 %v480
        %v561 = vunpack.c.l.b16 %v481
        %v562 = vunpack.c.l.b16 %v482
        %v563 = vunpack.c.l.b16 %v483
        %v564 = vunpack.c.l.b16 %v484
        %v565 = vunpack.c.l.b16 %v485
        %v566 = vunpack.c.l.b16 %v486
        %v567 = vunpack.c.l.b16 %v487
        %v568 = vunpack.c.l.b16 %v488
        %v569 = vunpack.c.l.b16 %v489
        %v570 = vunpack.c.l.b16 %v490
        %v571 = vunpack.c.l.b16 %v491
        %v572 = vunpack.c.l.b16 %v492
        %v573 = vunpack.c.l.b16 %v493
        %v574 = vunpack.c.l.b16 %v494
        %v575 = vpack.c.b16 %v544, %v543
        %v576 = vpack.c.b16 %v546, %v545
        %v577 = vpack.c.b16 %v548, %v547
        %v578 = vpack.c.b16 %v550, %v549
        %v579 = vpack.c.b16 %v552, %v551
        %v580 = vpack.c.b16 %v554, %v553
        %v581 = vpack.c.b16 %v556, %v555
        %v582 = vpack.c.b16 %v558, %v557
        %v583 = vpack.c.b16 %v560, %v559
        %v584 = vpack.c.b16 %v562, %v561
        %v585 = vpack.c.b16 %v564, %v563
        %v586 = vpack.c.b16 %v566, %v565
        %v587 = vpack.c.b16 %v568, %v567
        %v588 = vpack.c.b16 %v570, %v569
        %v589 = vpack.c.b16 %v572, %v571
        %v590 = vpack.c.b16 %v574, %v573
        %v623 = vunpack.c.l.b16 %v495
        %v624 = vunpack.c.h.b16 %v495
        %v625 = vunpack.c.l.b16 %v496
        %v626 = vunpack.c.h.b16 %v496
        %v627 = vunpack.c.l.b16 %v497
        %v628 = vunpack.c.h.b16 %v497
        %v629 = vunpack.c.l.b16 %v498
        %v630 = vunpack.c.h.b16 %v498
        %v631 = vunpack.c.l.b16 %v499
        %v632 = vunpack.c.h.b16 %v499
        %v633 = vunpack.c.l.b16 %v500
        %v634 = vunpack.c.h.b16 %v500
        %v635 = vunpack.c.l.b16 %v501
        %v636 = vunpack.c.h.b16 %v501
        %v637 = vunpack.c.l.b16 %v502
        %v638 = vunpack.c.h.b16 %v502
        %v639 = vunpack.c.l.b16 %v503
        %v640 = vunpack.c.h.b16 %v503
        %v641 = vunpack.c.l.b16 %v504
        %v642 = vunpack.c.h.b16 %v504
        %v643 = vunpack.c.l.b16 %v505
        %v644 = vunpack.c.h.b16 %v505
        %v645 = vunpack.c.l.b16 %v506
        %v646 = vunpack.c.h.b16 %v506
        %v647 = vunpack.c.l.b16 %v507
        %v648 = vunpack.c.h.b16 %v507
        %v649 = vunpack.c.l.b16 %v508
        %v650 = vunpack.c.h.b16 %v508
        %v651 = vunpack.c.l.b16 %v509
        %v652 = vunpack.c.h.b16 %v509
        %v653 = vunpack.c.l.b16 %v510
        %v654 = vunpack.c.h.b16 %v510
        %v655 = vpack.c.b16 %v625, %v623
        %v656 = vpack.c.b16 %v626, %v624
        %v657 = vpack.c.b16 %v629, %v627
        %v658 = vpack.c.b16 %v630, %v628
        %v659 = vpack.c.b16 %v633, %v631
        %v660 = vpack.c.b16 %v634, %v632
        %v661 = vpack.c.b16 %v637, %v635
        %v662 = vpack.c.b16 %v638, %v636
        %v663 = vpack.c.b16 %v641, %v639
        %v664 = vpack.c.b16 %v642, %v640
        %v665 = vpack.c.b16 %v645, %v643
        %v666 = vpack.c.b16 %v646, %v644
        %v667 = vpack.c.b16 %v649, %v647
        %v668 = vpack.c.b16 %v650, %v648
        %v669 = vpack.c.b16 %v653, %v651
        %v670 = vpack.c.b16 %v654, %v652
        %687 = vmatprep.subr.bf16.mxu0 %v656
        %688 = vmatpush1.bf16.msra.mxu0 %v655
        %689 = vmatprep.subr.bf16.mxu0 %v658
        %690 = vmatpush1.bf16.msra.mxu0 %v657
        %691 = vmatprep.subr.bf16.mxu0 %v660
        %692 = vmatpush1.bf16.msra.mxu0 %v659
        %693 = vmatprep.subr.bf16.mxu0 %v662
        %694 = vmatpush1.bf16.msra.mxu0 %v661
        %695 = vmatprep.subr.bf16.mxu0 %v664
        %696 = vmatpush1.bf16.msra.mxu0 %v663
        %697 = vmatprep.subr.bf16.mxu0 %v666
        %698 = vmatpush1.bf16.msra.mxu0 %v665
        %699 = vmatprep.subr.bf16.mxu0 %v668
        %700 = vmatpush1.bf16.msra.mxu0 %v667
        %701 = vmatprep.subr.bf16.mxu0 %v670
        %702 = vmatpush1.bf16.msra.mxu0 %v669
        %703 = vmatprep.subr.bf16.mxu0 0
        %704 = vmatpush1.bf16.msra.mxu0 0
        %705 = vmatprep.subr.bf16.mxu0 0
        %706 = vmatpush1.bf16.msra.mxu0 0
        %707 = vmatprep.subr.bf16.mxu0 0
        %708 = vmatpush1.bf16.msra.mxu0 0
        %709 = vmatprep.subr.bf16.mxu0 0
        %710 = vmatpush1.bf16.msra.mxu0 0
        %711 = vmatprep.subr.bf16.mxu0 0
        %712 = vmatpush1.bf16.msra.mxu0 0
        %713 = vmatprep.subr.bf16.mxu0 0
        %714 = vmatpush1.bf16.msra.mxu0 0
        %715 = vmatprep.subr.bf16.mxu0 0
        %716 = vmatpush1.bf16.msra.mxu0 0
        %717 = vmatprep.subr.bf16.mxu0 0
        %718 = vmatpush1.bf16.msra.mxu0 0
        %719 = vmatprep.mubr.bf16.mxu0 0
        %720 = vmatmul.mubr.bf16.gmra.mrb[0].mxu0 %v575
        %v721 = vpop.f32.mrb[0].mxu0
        %v722 = vadd.f32 0.0, %v721
        %v723 = vpop.f32.mrb[0].mxu0
        %v724 = vadd.f32 0.0, %v723
        %v725 = vpop.f32.mrb[0].mxu0
        %v726 = vadd.f32 0.0, %v725
        %v727 = vpop.f32.mrb[0].mxu0
        %v728 = vadd.f32 0.0, %v727
        %729 = vmatprep.mubr.bf16.mxu0 0
        %730 = vmatmul.mubr.bf16.gmra.mrb[0].mxu0 %v576
        %v731 = vpop.f32.mrb[0].mxu0
        %v732 = vadd.f32 0.0, %v731
        %v733 = vpop.f32.mrb[0].mxu0
        %v734 = vadd.f32 0.0, %v733
        %v735 = vpop.f32.mrb[0].mxu0
        %v736 = vadd.f32 0.0, %v735
        %v737 = vpop.f32.mrb[0].mxu0
        %v738 = vadd.f32 0.0, %v737
        %739 = vmatprep.mubr.bf16.mxu0 0
        %740 = vmatmul.mubr.bf16.gmra.mrb[0].mxu0 %v577
        %v741 = vpop.f32.mrb[0].mxu0
        %v742 = vadd.f32 0.0, %v741
        %v743 = vpop.f32.mrb[0].mxu0
        %v744 = vadd.f32 0.0, %v743
        %v745 = vpop.f32.mrb[0].mxu0
        %v746 = vadd.f32 0.0, %v745
        %v747 = vpop.f32.mrb[0].mxu0
        %v748 = vadd.f32 0.0, %v747
        %749 = vmatprep.mubr.bf16.mxu0 0
        %750 = vmatmul.mubr.bf16.gmra.mrb[0].mxu0 %v578
        %v751 = vpop.f32.mrb[0].mxu0
        %v752 = vadd.f32 0.0, %v751
        %v753 = vpop.f32.mrb[0].mxu0
        %v754 = vadd.f32 0.0, %v753
        %v755 = vpop.f32.mrb[0].mxu0
        %v756 = vadd.f32 0.0, %v755
        %v757 = vpop.f32.mrb[0].mxu0
        %v758 = vadd.f32 0.0, %v757
        %759 = vmatprep.mubr.bf16.mxu0 0
        %760 = vmatmul.mubr.bf16.gmra.mrb[0].mxu0 %v579
        %v761 = vpop.f32.mrb[0].mxu0
        %v762 = vadd.f32 0.0, %v761
        %v763 = vpop.f32.mrb[0].mxu0
        %v764 = vadd.f32 0.0, %v763
        %v765 = vpop.f32.mrb[0].mxu0
        %v766 = vadd.f32 0.0, %v765
        %v767 = vpop.f32.mrb[0].mxu0
        %v768 = vadd.f32 0.0, %v767
        %769 = vmatprep.mubr.bf16.mxu0 0
        %770 = vmatmul.mubr.bf16.gmra.mrb[0].mxu0 %v580
        %v771 = vpop.f32.mrb[0].mxu0
        %v772 = vadd.f32 0.0, %v771
        %v773 = vpop.f32.mrb[0].mxu0
        %v774 = vadd.f32 0.0, %v773
        %v775 = vpop.f32.mrb[0].mxu0
        %v776 = vadd.f32 0.0, %v775
        %v777 = vpop.f32.mrb[0].mxu0
        %v778 = vadd.f32 0.0, %v777
        %779 = vmatprep.mubr.bf16.mxu0 0
        %780 = vmatmul.mubr.bf16.gmra.mrb[0].mxu0 %v581
        %v781 = vpop.f32.mrb[0].mxu0
        %v782 = vadd.f32 0.0, %v781
        %v783 = vpop.f32.mrb[0].mxu0
        %v784 = vadd.f32 0.0, %v783
        %v785 = vpop.f32.mrb[0].mxu0
        %v786 = vadd.f32 0.0, %v785
        %v787 = vpop.f32.mrb[0].mxu0
        %v788 = vadd.f32 0.0, %v787
        %789 = vmatprep.mubr.bf16.mxu0 0
        %790 = vmatmul.mubr.bf16.gmra.mrb[0].mxu0 %v582
        %v791 = vpop.f32.mrb[0].mxu0
        %v792 = vadd.f32 0.0, %v791
        %v793 = vpop.f32.mrb[0].mxu0
        %v794 = vadd.f32 0.0, %v793
        %v795 = vpop.f32.mrb[0].mxu0
        %v796 = vadd.f32 0.0, %v795
        %v797 = vpop.f32.mrb[0].mxu0
        %v798 = vadd.f32 0.0, %v797
        %799 = vmatprep.mubr.bf16.mxu0 0
        %800 = vmatmul.mubr.bf16.gmra.mrb[0].mxu0 %v583
        %v801 = vpop.f32.mrb[0].mxu0
        %v802 = vadd.f32 0.0, %v801
        %v803 = vpop.f32.mrb[0].mxu0
        %v804 = vadd.f32 0.0, %v803
        %v805 = vpop.f32.mrb[0].mxu0
        %v806 = vadd.f32 0.0, %v805
        %v807 = vpop.f32.mrb[0].mxu0
        %v808 = vadd.f32 0.0, %v807
        %809 = vmatprep.mubr.bf16.mxu0 0
        %810 = vmatmul.mubr.bf16.gmra.mrb[0].mxu0 %v584
        %v811 = vpop.f32.mrb[0].mxu0
        %v812 = vadd.f32 0.0, %v811
        %v813 = vpop.f32.mrb[0].mxu0
        %v814 = vadd.f32 0.0, %v813
        %v815 = vpop.f32.mrb[0].mxu0
        %v816 = vadd.f32 0.0, %v815
        %v817 = vpop.f32.mrb[0].mxu0
        %v818 = vadd.f32 0.0, %v817
        %819 = vmatprep.mubr.bf16.mxu0 0
        %820 = vmatmul.mubr.bf16.gmra.mrb[0].mxu0 %v585
        %v821 = vpop.f32.mrb[0].mxu0
        %v822 = vadd.f32 0.0, %v821
        %v823 = vpop.f32.mrb[0].mxu0
        %v824 = vadd.f32 0.0, %v823
        %v825 = vpop.f32.mrb[0].mxu0
        %v826 = vadd.f32 0.0, %v825
        %v827 = vpop.f32.mrb[0].mxu0
        %v828 = vadd.f32 0.0, %v827
        %829 = vmatprep.mubr.bf16.mxu0 0
        %830 = vmatmul.mubr.bf16.gmra.mrb[0].mxu0 %v586
        %v831 = vpop.f32.mrb[0].mxu0
        %v832 = vadd.f32 0.0, %v831
        %v833 = vpop.f32.mrb[0].mxu0
        %v834 = vadd.f32 0.0, %v833
        %v835 = vpop.f32.mrb[0].mxu0
        %v836 = vadd.f32 0.0, %v835
        %v837 = vpop.f32.mrb[0].mxu0
        %v838 = vadd.f32 0.0, %v837
        %839 = vmatprep.mubr.bf16.mxu0 0
        %840 = vmatmul.mubr.bf16.gmra.mrb[0].mxu0 %v587
        %v841 = vpop.f32.mrb[0].mxu0
        %v842 = vadd.f32 0.0, %v841
        %v843 = vpop.f32.mrb[0].mxu0
        %v844 = vadd.f32 0.0, %v843
        %v845 = vpop.f32.mrb[0].mxu0
        %v846 = vadd.f32 0.0, %v845
        %v847 = vpop.f32.mrb[0].mxu0
        %v848 = vadd.f32 0.0, %v847
        %849 = vmatprep.mubr.bf16.mxu0 0
        %850 = vmatmul.mubr.bf16.gmra.mrb[0].mxu0 %v588
        %v851 = vpop.f32.mrb[0].mxu0
        %v852 = vadd.f32 0.0, %v851
        %v853 = vpop.f32.mrb[0].mxu0
        %v854 = vadd.f32 0.0, %v853
        %v855 = vpop.f32.mrb[0].mxu0
        %v856 = vadd.f32 0.0, %v855
        %v857 = vpop.f32.mrb[0].mxu0
        %v858 = vadd.f32 0.0, %v857
        %859 = vmatprep.mubr.bf16.mxu0 0
        %860 = vmatmul.mubr.bf16.gmra.mrb[0].mxu0 %v589
        %v861 = vpop.f32.mrb[0].mxu0
        %v862 = vadd.f32 0.0, %v861
        %v863 = vpop.f32.mrb[0].mxu0
        %v864 = vadd.f32 0.0, %v863
        %v865 = vpop.f32.mrb[0].mxu0
        %v866 = vadd.f32 0.0, %v865
        %v867 = vpop.f32.mrb[0].mxu0
        %v868 = vadd.f32 0.0, %v867
        %869 = vmatprep.mubr.bf16.mxu0 0
        %870 = vmatmul.mubr.bf16.gmra.mrb[0].mxu0 %v590
        %v871 = vpop.f32.mrb[0].mxu0
        %v872 = vadd.f32 0.0, %v871
        %v873 = vpop.f32.mrb[0].mxu0
        %v874 = vadd.f32 0.0, %v873
        %v875 = vpop.f32.mrb[0].mxu0
        %v876 = vadd.f32 0.0, %v875
        %v877 = vpop.f32.mrb[0].mxu0
        %v878 = vadd.f32 0.0, %v877
        %879 = vdwg.mxu0
        %v880 = vadd.f32 %v399, %v722
        %v881 = vadd.f32 %v400, %v724
        %v882 = vadd.f32 %v401, %v726
        %v883 = vadd.f32 %v402, %v728
        %v884 = vadd.f32 %v403, %v732
        %v885 = vadd.f32 %v404, %v734
        %v886 = vadd.f32 %v405, %v736
        %v887 = vadd.f32 %v406, %v738
        %v888 = vadd.f32 %v407, %v742
        %v889 = vadd.f32 %v408, %v744
        %v890 = vadd.f32 %v409, %v746
        %v891 = vadd.f32 %v410, %v748
        %v892 = vadd.f32 %v411, %v752
        %v893 = vadd.f32 %v412, %v754
        %v894 = vadd.f32 %v413, %v756
        %v895 = vadd.f32 %v414, %v758
        %v896 = vadd.f32 %v415, %v762
        %v897 = vadd.f32 %v416, %v764
        %v898 = vadd.f32 %v417, %v766
        %v899 = vadd.f32 %v418, %v768
        %v900 = vadd.f32 %v419, %v772
        %v901 = vadd.f32 %v420, %v774
        %v902 = vadd.f32 %v421, %v776
        %v903 = vadd.f32 %v422, %v778
        %v904 = vadd.f32 %v423, %v782
        %v905 = vadd.f32 %v424, %v784
        %v906 = vadd.f32 %v425, %v786
        %v907 = vadd.f32 %v426, %v788
        %v908 = vadd.f32 %v427, %v792
        %v909 = vadd.f32 %v428, %v794
        %v910 = vadd.f32 %v429, %v796
        %v911 = vadd.f32 %v430, %v798
        %v912 = vadd.f32 %v431, %v802
        %v913 = vadd.f32 %v432, %v804
        %v914 = vadd.f32 %v433, %v806
        %v915 = vadd.f32 %v434, %v808
        %v916 = vadd.f32 %v435, %v812
        %v917 = vadd.f32 %v436, %v814
        %v918 = vadd.f32 %v437, %v816
        %v919 = vadd.f32 %v438, %v818
        %v920 = vadd.f32 %v439, %v822
        %v921 = vadd.f32 %v440, %v824
        %v922 = vadd.f32 %v441, %v826
        %v923 = vadd.f32 %v442, %v828
        %v924 = vadd.f32 %v443, %v832
        %v925 = vadd.f32 %v444, %v834
        %v926 = vadd.f32 %v445, %v836
        %v927 = vadd.f32 %v446, %v838
        %v928 = vadd.f32 %v447, %v842
        %v929 = vadd.f32 %v448, %v844
        %v930 = vadd.f32 %v449, %v846
        %v931 = vadd.f32 %v450, %v848
        %v932 = vadd.f32 %v451, %v852
        %v933 = vadd.f32 %v452, %v854
        %v934 = vadd.f32 %v453, %v856
        %v935 = vadd.f32 %v454, %v858
        %v936 = vadd.f32 %v455, %v862
        %v937 = vadd.f32 %v456, %v864
        %v938 = vadd.f32 %v457, %v866
        %v939 = vadd.f32 %v458, %v868
        %v940 = vadd.f32 %v459, %v872
        %v941 = vadd.f32 %v460, %v874
        %v942 = vadd.f32 %v461, %v876
        %v943 = vadd.f32 %v462, %v878
        %944 = vst [vmem:[#allocation2] sm:$0xff] %v880
        %vm945 = vcmask 523264
        %946 = vst.msk [vmem:[#allocation2 + $0x8] sm:$0xff] %vm945, %v881
        %947 = vst [vmem:[#allocation2 + $0x10] sm:$0xff] %v882
        %948 = vst.msk [vmem:[#allocation2 + $0x18] sm:$0xff] %vm945, %v883
        %949 = vst [vmem:[#allocation2 + $0x20] sm:$0xff] %v884
        %950 = vst.msk [vmem:[#allocation2 + $0x28] sm:$0xff] %vm945, %v885
        %951 = vst [vmem:[#allocation2 + $0x30] sm:$0xff] %v886
        %952 = vst.msk [vmem:[#allocation2 + $0x38] sm:$0xff] %vm945, %v887
        %953 = vst [vmem:[#allocation2 + $0x40] sm:$0xff] %v888
        %954 = vst.msk [vmem:[#allocation2 + $0x48] sm:$0xff] %vm945, %v889
        %955 = vst [vmem:[#allocation2 + $0x50] sm:$0xff] %v890
        %956 = vst.msk [vmem:[#allocation2 + $0x58] sm:$0xff] %vm945, %v891
        %957 = vst [vmem:[#allocation2 + $0x60] sm:$0xff] %v892
        %958 = vst.msk [vmem:[#allocation2 + $0x68] sm:$0xff] %vm945, %v893
        %959 = vst [vmem:[#allocation2 + $0x70] sm:$0xff] %v894
        %960 = vst.msk [vmem:[#allocation2 + $0x78] sm:$0xff] %vm945, %v895
        %961 = vst [vmem:[#allocation2 + $0x80] sm:$0xff] %v896
        %962 = vst.msk [vmem:[#allocation2 + $0x88] sm:$0xff] %vm945, %v897
        %963 = vst [vmem:[#allocation2 + $0x90] sm:$0xff] %v898
        %964 = vst.msk [vmem:[#allocation2 + $0x98] sm:$0xff] %vm945, %v899
        %965 = vst [vmem:[#allocation2 + $0xa0] sm:$0xff] %v900
        %966 = vst.msk [vmem:[#allocation2 + $0xa8] sm:$0xff] %vm945, %v901
        %967 = vst [vmem:[#allocation2 + $0xb0] sm:$0xff] %v902
        %968 = vst.msk [vmem:[#allocation2 + $0xb8] sm:$0xff] %vm945, %v903
        %969 = vst [vmem:[#allocation2 + $0xc0] sm:$0xff] %v904
        %970 = vst.msk [vmem:[#allocation2 + $0xc8] sm:$0xff] %vm945, %v905
        %971 = vst [vmem:[#allocation2 + $0xd0] sm:$0xff] %v906
        %972 = vst.msk [vmem:[#allocation2 + $0xd8] sm:$0xff] %vm945, %v907
        %973 = vst [vmem:[#allocation2 + $0xe0] sm:$0xff] %v908
        %974 = vst.msk [vmem:[#allocation2 + $0xe8] sm:$0xff] %vm945, %v909
        %975 = vst [vmem:[#allocation2 + $0xf0] sm:$0xff] %v910
        %976 = vst.msk [vmem:[#allocation2 + $0xf8] sm:$0xff] %vm945, %v911
        %977 = vst [vmem:[#allocation2 + $0x100] sm:$0xff] %v912
        %978 = vst.msk [vmem:[#allocation2 + $0x108] sm:$0xff] %vm945, %v913
        %979 = vst [vmem:[#allocation2 + $0x110] sm:$0xff] %v914
        %980 = vst.msk [vmem:[#allocation2 + $0x118] sm:$0xff] %vm945, %v915
        %981 = vst [vmem:[#allocation2 + $0x120] sm:$0xff] %v916
        %982 = vst.msk [vmem:[#allocation2 + $0x128] sm:$0xff] %vm945, %v917
        %983 = vst [vmem:[#allocation2 + $0x130] sm:$0xff] %v918
        %984 = vst.msk [vmem:[#allocation2 + $0x138] sm:$0xff] %vm945, %v919
        %985 = vst [vmem:[#allocation2 + $0x140] sm:$0xff] %v920
        %986 = vst.msk [vmem:[#allocation2 + $0x148] sm:$0xff] %vm945, %v921
        %987 = vst [vmem:[#allocation2 + $0x150] sm:$0xff] %v922
        %988 = vst.msk [vmem:[#allocation2 + $0x158] sm:$0xff] %vm945, %v923
        %989 = vst [vmem:[#allocation2 + $0x160] sm:$0xff] %v924
        %990 = vst.msk [vmem:[#allocation2 + $0x168] sm:$0xff] %vm945, %v925
        %991 = vst [vmem:[#allocation2 + $0x170] sm:$0xff] %v926
        %992 = vst.msk [vmem:[#allocation2 + $0x178] sm:$0xff] %vm945, %v927
        %993 = vst [vmem:[#allocation2 + $0x180] sm:$0xff] %v928
        %994 = vst.msk [vmem:[#allocation2 + $0x188] sm:$0xff] %vm945, %v929
        %995 = vst [vmem:[#allocation2 + $0x190] sm:$0xff] %v930
        %996 = vst.msk [vmem:[#allocation2 + $0x198] sm:$0xff] %vm945, %v931
        %997 = vst [vmem:[#allocation2 + $0x1a0] sm:$0xff] %v932
        %998 = vst.msk [vmem:[#allocation2 + $0x1a8] sm:$0xff] %vm945, %v933
        %999 = vst [vmem:[#allocation2 + $0x1b0] sm:$0xff] %v934
        %1000 = vst.msk [vmem:[#allocation2 + $0x1b8] sm:$0xff] %vm945, %v935
        %1001 = vst [vmem:[#allocation2 + $0x1c0] sm:$0xff] %v936
        %1002 = vst.msk [vmem:[#allocation2 + $0x1c8] sm:$0xff] %vm945, %v937
        %1003 = vst [vmem:[#allocation2 + $0x1d0] sm:$0xff] %v938
        %1004 = vst.msk [vmem:[#allocation2 + $0x1d8] sm:$0xff] %vm945, %v939
        %1005 = vst [vmem:[#allocation2 + $0x1e0] sm:$0xff] %v940
        %1006 = vst.msk [vmem:[#allocation2 + $0x1e8] sm:$0xff] %vm945, %v941
        %1007 = vst [vmem:[#allocation2 + $0x1f0] sm:$0xff] %v942
        %1008 = vst.msk [vmem:[#allocation2 + $0x1f8] sm:$0xff] %vm945, %v943
        // Predicated region
        $region41: #{tpu_custom_call.1} parent=27 // pred_check
          %p1009 = pneg %p330
        $region42: #{tpu_custom_call.1} parent=27 // pred_check_branch
          %1011 = sbr.rel (%p1009) target = $region44
        $region43: #{tpu_custom_call.1} parent=27 // pred_region
          %v1012 = vld [vmem:[#allocation2] sm:$0xff]
          %v1013 = vld [vmem:[#allocation2 + $0x8] sm:$0xff]
          %v1014 = vld [vmem:[#allocation2 + $0x10] sm:$0xff]
          %v1015 = vld [vmem:[#allocation2 + $0x18] sm:$0xff]
          %v1016 = vld [vmem:[#allocation2 + $0x20] sm:$0xff]
          %v1017 = vld [vmem:[#allocation2 + $0x28] sm:$0xff]
          %v1018 = vld [vmem:[#allocation2 + $0x30] sm:$0xff]
          %v1019 = vld [vmem:[#allocation2 + $0x38] sm:$0xff]
          %v1020 = vld [vmem:[#allocation2 + $0x40] sm:$0xff]
          %v1021 = vld [vmem:[#allocation2 + $0x48] sm:$0xff]
          %v1022 = vld [vmem:[#allocation2 + $0x50] sm:$0xff]
          %v1023 = vld [vmem:[#allocation2 + $0x58] sm:$0xff]
          %v1024 = vld [vmem:[#allocation2 + $0x60] sm:$0xff]
          %v1025 = vld [vmem:[#allocation2 + $0x68] sm:$0xff]
          %v1026 = vld [vmem:[#allocation2 + $0x70] sm:$0xff]
          %v1027 = vld [vmem:[#allocation2 + $0x78] sm:$0xff]
          %v1028 = vld [vmem:[#allocation2 + $0x80] sm:$0xff]
          %v1029 = vld [vmem:[#allocation2 + $0x88] sm:$0xff]
          %v1030 = vld [vmem:[#allocation2 + $0x90] sm:$0xff]
          %v1031 = vld [vmem:[#allocation2 + $0x98] sm:$0xff]
          %v1032 = vld [vmem:[#allocation2 + $0xa0] sm:$0xff]
          %v1033 = vld [vmem:[#allocation2 + $0xa8] sm:$0xff]
          %v1034 = vld [vmem:[#allocation2 + $0xb0] sm:$0xff]
          %v1035 = vld [vmem:[#allocation2 + $0xb8] sm:$0xff]
          %v1036 = vld [vmem:[#allocation2 + $0xc0] sm:$0xff]
          %v1037 = vld [vmem:[#allocation2 + $0xc8] sm:$0xff]
          %v1038 = vld [vmem:[#allocation2 + $0xd0] sm:$0xff]
          %v1039 = vld [vmem:[#allocation2 + $0xd8] sm:$0xff]
          %v1040 = vld [vmem:[#allocation2 + $0xe0] sm:$0xff]
          %v1041 = vld [vmem:[#allocation2 + $0xe8] sm:$0xff]
          %v1042 = vld [vmem:[#allocation2 + $0xf0] sm:$0xff]
          %v1043 = vld [vmem:[#allocation2 + $0xf8] sm:$0xff]
          %v1044 = vld [vmem:[#allocation2 + $0x100] sm:$0xff]
          %v1045 = vld [vmem:[#allocation2 + $0x108] sm:$0xff]
          %v1046 = vld [vmem:[#allocation2 + $0x110] sm:$0xff]
          %v1047 = vld [vmem:[#allocation2 + $0x118] sm:$0xff]
          %v1048 = vld [vmem:[#allocation2 + $0x120] sm:$0xff]
          %v1049 = vld [vmem:[#allocation2 + $0x128] sm:$0xff]
          %v1050 = vld [vmem:[#allocation2 + $0x130] sm:$0xff]
          %v1051 = vld [vmem:[#allocation2 + $0x138] sm:$0xff]
          %v1052 = vld [vmem:[#allocation2 + $0x140] sm:$0xff]
          %v1053 = vld [vmem:[#allocation2 + $0x148] sm:$0xff]
          %v1054 = vld [vmem:[#allocation2 + $0x150] sm:$0xff]
          %v1055 = vld [vmem:[#allocation2 + $0x158] sm:$0xff]
          %v1056 = vld [vmem:[#allocation2 + $0x160] sm:$0xff]
          %v1057 = vld [vmem:[#allocation2 + $0x168] sm:$0xff]
          %v1058 = vld [vmem:[#allocation2 + $0x170] sm:$0xff]
          %v1059 = vld [vmem:[#allocation2 + $0x178] sm:$0xff]
          %v1060 = vld [vmem:[#allocation2 + $0x180] sm:$0xff]
          %v1061 = vld [vmem:[#allocation2 + $0x188] sm:$0xff]
          %v1062 = vld [vmem:[#allocation2 + $0x190] sm:$0xff]
          %v1063 = vld [vmem:[#allocation2 + $0x198] sm:$0xff]
          %v1064 = vld [vmem:[#allocation2 + $0x1a0] sm:$0xff]
          %v1065 = vld [vmem:[#allocation2 + $0x1a8] sm:$0xff]
          %v1066 = vld [vmem:[#allocation2 + $0x1b0] sm:$0xff]
          %v1067 = vld [vmem:[#allocation2 + $0x1b8] sm:$0xff]
          %v1068 = vld [vmem:[#allocation2 + $0x1c0] sm:$0xff]
          %v1069 = vld [vmem:[#allocation2 + $0x1c8] sm:$0xff]
          %v1070 = vld [vmem:[#allocation2 + $0x1d0] sm:$0xff]
          %v1071 = vld [vmem:[#allocation2 + $0x1d8] sm:$0xff]
          %v1072 = vld [vmem:[#allocation2 + $0x1e0] sm:$0xff]
          %v1073 = vld [vmem:[#allocation2 + $0x1e8] sm:$0xff]
          %v1074 = vld [vmem:[#allocation2 + $0x1f0] sm:$0xff]
          %v1075 = vld [vmem:[#allocation2 + $0x1f8] sm:$0xff]
          %v1076 = vmul.f32 %v1012, %v1012
          %v1077 = vmul.f32 %v1014, %v1014
          %v1078 = vmul.f32 %v1016, %v1016
          %v1079 = vmul.f32 %v1018, %v1018
          %v1080 = vmul.f32 %v1020, %v1020
          %v1081 = vmul.f32 %v1022, %v1022
          %v1082 = vmul.f32 %v1024, %v1024
          %v1083 = vmul.f32 %v1026, %v1026
          %v1084 = vmul.f32 %v1028, %v1028
          %v1085 = vmul.f32 %v1030, %v1030
          %v1086 = vmul.f32 %v1032, %v1032
          %v1087 = vmul.f32 %v1034, %v1034
          %v1088 = vmul.f32 %v1036, %v1036
          %v1089 = vmul.f32 %v1038, %v1038
          %v1090 = vmul.f32 %v1040, %v1040
          %v1091 = vmul.f32 %v1042, %v1042
          %v1092 = vmul.f32 %v1044, %v1044
          %v1093 = vmul.f32 %v1046, %v1046
          %v1094 = vmul.f32 %v1048, %v1048
          %v1095 = vmul.f32 %v1050, %v1050
          %v1096 = vmul.f32 %v1052, %v1052
          %v1097 = vmul.f32 %v1054, %v1054
          %v1098 = vmul.f32 %v1056, %v1056
          %v1099 = vmul.f32 %v1058, %v1058
          %v1100 = vmul.f32 %v1060, %v1060
          %v1101 = vmul.f32 %v1062, %v1062
          %v1102 = vmul.f32 %v1064, %v1064
          %v1103 = vmul.f32 %v1066, %v1066
          %v1104 = vmul.f32 %v1068, %v1068
          %v1105 = vmul.f32 %v1070, %v1070
          %v1106 = vmul.f32 %v1072, %v1072
          %v1107 = vmul.f32 %v1074, %v1074
          %v1108 = vsel %vm945, %v1076, 0.0
          %1109 = vadd.xlane.f32.xlu0 %v1108
          %v1110 = vpop.xlane.xlu0 %1109
          %v1111 = vsel %vm945, %v1077, 0.0
          %1112 = vadd.xlane.f32.xlu0 %v1111
          %v1113 = vpop.xlane.xlu0 %1112
          %v1114 = vsel %vm945, %v1078, 0.0
          %1115 = vadd.xlane.f32.xlu0 %v1114
          %v1116 = vpop.xlane.xlu0 %1115
          %v1117 = vsel %vm945, %v1079, 0.0
          %1118 = vadd.xlane.f32.xlu0 %v1117
          %v1119 = vpop.xlane.xlu0 %1118
          %v1120 = vsel %vm945, %v1080, 0.0
          %1121 = vadd.xlane.f32.xlu0 %v1120
          %v1122 = vpop.xlane.xlu0 %1121
          %v1123 = vsel %vm945, %v1081, 0.0
          %1124 = vadd.xlane.f32.xlu0 %v1123
          %v1125 = vpop.xlane.xlu0 %1124
          %v1126 = vsel %vm945, %v1082, 0.0
          %1127 = vadd.xlane.f32.xlu0 %v1126
          %v1128 = vpop.xlane.xlu0 %1127
          %v1129 = vsel %vm945, %v1083, 0.0
          %1130 = vadd.xlane.f32.xlu0 %v1129
          %v1131 = vpop.xlane.xlu0 %1130
          %v1132 = vsel %vm945, %v1084, 0.0
          %1133 = vadd.xlane.f32.xlu0 %v1132
          %v1134 = vpop.xlane.xlu0 %1133
          %v1135 = vsel %vm945, %v1085, 0.0
          %1136 = vadd.xlane.f32.xlu0 %v1135
          %v1137 = vpop.xlane.xlu0 %1136
          %v1138 = vsel %vm945, %v1086, 0.0
          %1139 = vadd.xlane.f32.xlu0 %v1138
          %v1140 = vpop.xlane.xlu0 %1139
          %v1141 = vsel %vm945, %v1087, 0.0
          %1142 = vadd.xlane.f32.xlu0 %v1141
          %v1143 = vpop.xlane.xlu0 %1142
          %v1144 = vsel %vm945, %v1088, 0.0
          %1145 = vadd.xlane.f32.xlu0 %v1144
          %v1146 = vpop.xlane.xlu0 %1145
          %v1147 = vsel %vm945, %v1089, 0.0
          %1148 = vadd.xlane.f32.xlu0 %v1147
          %v1149 = vpop.xlane.xlu0 %1148
          %v1150 = vsel %vm945, %v1090, 0.0
          %1151 = vadd.xlane.f32.xlu0 %v1150
          %v1152 = vpop.xlane.xlu0 %1151
          %v1153 = vsel %vm945, %v1091, 0.0
          %1154 = vadd.xlane.f32.xlu0 %v1153
          %v1155 = vpop.xlane.xlu0 %1154
          %v1156 = vsel %vm945, %v1092, 0.0
          %1157 = vadd.xlane.f32.xlu0 %v1156
          %v1158 = vpop.xlane.xlu0 %1157
          %v1159 = vsel %vm945, %v1093, 0.0
          %1160 = vadd.xlane.f32.xlu0 %v1159
          %v1161 = vpop.xlane.xlu0 %1160
          %v1162 = vsel %vm945, %v1094, 0.0
          %1163 = vadd.xlane.f32.xlu0 %v1162
          %v1164 = vpop.xlane.xlu0 %1163
          %v1165 = vsel %vm945, %v1095, 0.0
          %1166 = vadd.xlane.f32.xlu0 %v1165
          %v1167 = vpop.xlane.xlu0 %1166
          %v1168 = vsel %vm945, %v1096, 0.0
          %1169 = vadd.xlane.f32.xlu0 %v1168
          %v1170 = vpop.xlane.xlu0 %1169
          %v1171 = vsel %vm945, %v1097, 0.0
          %1172 = vadd.xlane.f32.xlu0 %v1171
          %v1173 = vpop.xlane.xlu0 %1172
          %v1174 = vsel %vm945, %v1098, 0.0
          %1175 = vadd.xlane.f32.xlu0 %v1174
          %v1176 = vpop.xlane.xlu0 %1175
          %v1177 = vsel %vm945, %v1099, 0.0
          %1178 = vadd.xlane.f32.xlu0 %v1177
          %v1179 = vpop.xlane.xlu0 %1178
          %v1180 = vsel %vm945, %v1100, 0.0
          %1181 = vadd.xlane.f32.xlu0 %v1180
          %v1182 = vpop.xlane.xlu0 %1181
          %v1183 = vsel %vm945, %v1101, 0.0
          %1184 = vadd.xlane.f32.xlu0 %v1183
          %v1185 = vpop.xlane.xlu0 %1184
          %v1186 = vsel %vm945, %v1102, 0.0
          %1187 = vadd.xlane.f32.xlu0 %v1186
          %v1188 = vpop.xlane.xlu0 %1187
          %v1189 = vsel %vm945, %v1103, 0.0
          %1190 = vadd.xlane.f32.xlu0 %v1189
          %v1191 = vpop.xlane.xlu0 %1190
          %v1192 = vsel %vm945, %v1104, 0.0
          %1193 = vadd.xlane.f32.xlu0 %v1192
          %v1194 = vpop.xlane.xlu0 %1193
          %v1195 = vsel %vm945, %v1105, 0.0
          %1196 = vadd.xlane.f32.xlu0 %v1195
          %v1197 = vpop.xlane.xlu0 %1196
          %v1198 = vsel %vm945, %v1106, 0.0
          %1199 = vadd.xlane.f32.xlu0 %v1198
          %v1200 = vpop.xlane.xlu0 %1199
          %v1201 = vsel %vm945, %v1107, 0.0
          %1202 = vadd.xlane.f32.xlu0 %v1201
          %v1203 = vpop.xlane.xlu0 %1202
          %v1204 = vmax.f32 %v1110, 1e-24
          %v1205 = vmax.f32 %v1113, 1e-24
          %v1206 = vmax.f32 %v1116, 1e-24
          %v1207 = vmax.f32 %v1119, 1e-24
          %v1208 = vmax.f32 %v1122, 1e-24
          %v1209 = vmax.f32 %v1125, 1e-24
          %v1210 = vmax.f32 %v1128, 1e-24
          %v1211 = vmax.f32 %v1131, 1e-24
          %v1212 = vmax.f32 %v1134, 1e-24
          %v1213 = vmax.f32 %v1137, 1e-24
          %v1214 = vmax.f32 %v1140, 1e-24
          %v1215 = vmax.f32 %v1143, 1e-24
          %v1216 = vmax.f32 %v1146, 1e-24
          %v1217 = vmax.f32 %v1149, 1e-24
          %v1218 = vmax.f32 %v1152, 1e-24
          %v1219 = vmax.f32 %v1155, 1e-24
          %v1220 = vmax.f32 %v1158, 1e-24
          %v1221 = vmax.f32 %v1161, 1e-24
          %v1222 = vmax.f32 %v1164, 1e-24
          %v1223 = vmax.f32 %v1167, 1e-24
          %v1224 = vmax.f32 %v1170, 1e-24
          %v1225 = vmax.f32 %v1173, 1e-24
          %v1226 = vmax.f32 %v1176, 1e-24
          %v1227 = vmax.f32 %v1179, 1e-24
          %v1228 = vmax.f32 %v1182, 1e-24
          %v1229 = vmax.f32 %v1185, 1e-24
          %v1230 = vmax.f32 %v1188, 1e-24
          %v1231 = vmax.f32 %v1191, 1e-24
          %v1232 = vmax.f32 %v1194, 1e-24
          %v1233 = vmax.f32 %v1197, 1e-24
          %v1234 = vmax.f32 %v1200, 1e-24
          %v1235 = vmax.f32 %v1203, 1e-24
          %v1236 = vrsqrt.pop %v1204
          %v1237 = vrsqrt.pop %v1205
          %v1238 = vrsqrt.pop %v1206
          %v1239 = vrsqrt.pop %v1207
          %v1240 = vrsqrt.pop %v1208
          %v1241 = vrsqrt.pop %v1209
          %v1242 = vrsqrt.pop %v1210
          %v1243 = vrsqrt.pop %v1211
          %v1244 = vrsqrt.pop %v1212
          %v1245 = vrsqrt.pop %v1213
          %v1246 = vrsqrt.pop %v1214
          %v1247 = vrsqrt.pop %v1215
          %v1248 = vrsqrt.pop %v1216
          %v1249 = vrsqrt.pop %v1217
          %v1250 = vrsqrt.pop %v1218
          %v1251 = vrsqrt.pop %v1219
          %v1252 = vrsqrt.pop %v1220
          %v1253 = vrsqrt.pop %v1221
          %v1254 = vrsqrt.pop %v1222
          %v1255 = vrsqrt.pop %v1223
          %v1256 = vrsqrt.pop %v1224
          %v1257 = vrsqrt.pop %v1225
          %v1258 = vrsqrt.pop %v1226
          %v1259 = vrsqrt.pop %v1227
          %v1260 = vrsqrt.pop %v1228
          %v1261 = vrsqrt.pop %v1229
          %v1262 = vrsqrt.pop %v1230
          %v1263 = vrsqrt.pop %v1231
          %v1264 = vrsqrt.pop %v1232
          %v1265 = vrsqrt.pop %v1233
          %v1266 = vrsqrt.pop %v1234
          %v1267 = vrsqrt.pop %v1235
          %v1268 = vmul.f32 %v1236, 16.0
          %v1269 = vmul.f32 %v1237, 16.0
          %v1270 = vmul.f32 %v1238, 16.0
          %v1271 = vmul.f32 %v1239, 16.0
          %v1272 = vmul.f32 %v1240, 16.0
          %v1273 = vmul.f32 %v1241, 16.0
          %v1274 = vmul.f32 %v1242, 16.0
          %v1275 = vmul.f32 %v1243, 16.0
          %v1276 = vmul.f32 %v1244, 16.0
          %v1277 = vmul.f32 %v1245, 16.0
          %v1278 = vmul.f32 %v1246, 16.0
          %v1279 = vmul.f32 %v1247, 16.0
          %v1280 = vmul.f32 %v1248, 16.0
          %v1281 = vmul.f32 %v1249, 16.0
          %v1282 = vmul.f32 %v1250, 16.0
          %v1283 = vmul.f32 %v1251, 16.0
          %v1284 = vmul.f32 %v1252, 16.0
          %v1285 = vmul.f32 %v1253, 16.0
          %v1286 = vmul.f32 %v1254, 16.0
          %v1287 = vmul.f32 %v1255, 16.0
          %v1288 = vmul.f32 %v1256, 16.0
          %v1289 = vmul.f32 %v1257, 16.0
          %v1290 = vmul.f32 %v1258, 16.0
          %v1291 = vmul.f32 %v1259, 16.0
          %v1292 = vmul.f32 %v1260, 16.0
          %v1293 = vmul.f32 %v1261, 16.0
          %v1294 = vmul.f32 %v1262, 16.0
          %v1295 = vmul.f32 %v1263, 16.0
          %v1296 = vmul.f32 %v1264, 16.0
          %v1297 = vmul.f32 %v1265, 16.0
          %v1298 = vmul.f32 %v1266, 16.0
          %v1299 = vmul.f32 %v1267, 16.0
          %v1300 = vmul.f32 %v1012, %v1268
          %v1301 = vmul.f32 %v1014, %v1269
          %v1302 = vmul.f32 %v1016, %v1270
          %v1303 = vmul.f32 %v1018, %v1271
          %v1304 = vmul.f32 %v1020, %v1272
          %v1305 = vmul.f32 %v1022, %v1273
          %v1306 = vmul.f32 %v1024, %v1274
          %v1307 = vmul.f32 %v1026, %v1275
          %v1308 = vmul.f32 %v1028, %v1276
          %v1309 = vmul.f32 %v1030, %v1277
          %v1310 = vmul.f32 %v1032, %v1278
          %v1311 = vmul.f32 %v1034, %v1279
          %v1312 = vmul.f32 %v1036, %v1280
          %v1313 = vmul.f32 %v1038, %v1281
          %v1314 = vmul.f32 %v1040, %v1282
          %v1315 = vmul.f32 %v1042, %v1283
          %v1316 = vmul.f32 %v1044, %v1284
          %v1317 = vmul.f32 %v1046, %v1285
          %v1318 = vmul.f32 %v1048, %v1286
          %v1319 = vmul.f32 %v1050, %v1287
          %v1320 = vmul.f32 %v1052, %v1288
          %v1321 = vmul.f32 %v1054, %v1289
          %v1322 = vmul.f32 %v1056, %v1290
          %v1323 = vmul.f32 %v1058, %v1291
          %v1324 = vmul.f32 %v1060, %v1292
          %v1325 = vmul.f32 %v1062, %v1293
          %v1326 = vmul.f32 %v1064, %v1294
          %v1327 = vmul.f32 %v1066, %v1295
          %v1328 = vmul.f32 %v1068, %v1296
          %v1329 = vmul.f32 %v1070, %v1297
          %v1330 = vmul.f32 %v1072, %v1298
          %v1331 = vmul.f32 %v1074, %v1299
          %v1332 = vpack.c.bf16 %v1301, %v1300
          %v1333 = vpack.c.bf16 %v1303, %v1302
          %v1334 = vpack.c.bf16 %v1305, %v1304
          %v1335 = vpack.c.bf16 %v1307, %v1306
          %v1336 = vpack.c.bf16 %v1309, %v1308
          %v1337 = vpack.c.bf16 %v1311, %v1310
          %v1338 = vpack.c.bf16 %v1313, %v1312
          %v1339 = vpack.c.bf16 %v1315, %v1314
          %v1340 = vpack.c.bf16 %v1317, %v1316
          %v1341 = vpack.c.bf16 %v1319, %v1318
          %v1342 = vpack.c.bf16 %v1321, %v1320
          %v1343 = vpack.c.bf16 %v1323, %v1322
          %v1344 = vpack.c.bf16 %v1325, %v1324
          %v1345 = vpack.c.bf16 %v1327, %v1326
          %v1346 = vpack.c.bf16 %v1329, %v1328
          %v1347 = vpack.c.bf16 %v1331, %v1330
          %v1364 = vunpack.c.l.b16 %v1332
          %v1365 = vunpack.c.h.b16 %v1332
          %v1366 = vunpack.c.l.b16 %v1333
          %v1367 = vunpack.c.h.b16 %v1333
          %v1368 = vunpack.c.l.b16 %v1334
          %v1369 = vunpack.c.h.b16 %v1334
          %v1370 = vunpack.c.l.b16 %v1335
          %v1371 = vunpack.c.h.b16 %v1335
          %v1372 = vunpack.c.l.b16 %v1336
          %v1373 = vunpack.c.h.b16 %v1336
          %v1374 = vunpack.c.l.b16 %v1337
          %v1375 = vunpack.c.h.b16 %v1337
          %v1376 = vunpack.c.l.b16 %v1338
          %v1377 = vunpack.c.h.b16 %v1338
          %v1378 = vunpack.c.l.b16 %v1339
          %v1379 = vunpack.c.h.b16 %v1339
          %v1380 = vunpack.c.l.b16 %v1340
          %v1381 = vunpack.c.h.b16 %v1340
          %v1382 = vunpack.c.l.b16 %v1341
          %v1383 = vunpack.c.h.b16 %v1341
          %v1384 = vunpack.c.l.b16 %v1342
          %v1385 = vunpack.c.h.b16 %v1342
          %v1386 = vunpack.c.l.b16 %v1343
          %v1387 = vunpack.c.h.b16 %v1343
          %v1388 = vunpack.c.l.b16 %v1344
          %v1389 = vunpack.c.h.b16 %v1344
          %v1390 = vunpack.c.l.b16 %v1345
          %v1391 = vunpack.c.h.b16 %v1345
          %v1392 = vunpack.c.l.b16 %v1346
          %v1393 = vunpack.c.h.b16 %v1346
          %v1394 = vunpack.c.l.b16 %v1347
          %v1395 = vunpack.c.h.b16 %v1347
          %v1396 = vpack.c.b16 %v1364, %v1364
          %v1397 = vpack.c.b16 %v1365, %v1365
          %v1398 = vpack.c.b16 %v1366, %v1366
          %v1399 = vpack.c.b16 %v1367, %v1367
          %v1400 = vpack.c.b16 %v1368, %v1368
          %v1401 = vpack.c.b16 %v1369, %v1369
          %v1402 = vpack.c.b16 %v1370, %v1370
          %v1403 = vpack.c.b16 %v1371, %v1371
          %v1404 = vpack.c.b16 %v1372, %v1372
          %v1405 = vpack.c.b16 %v1373, %v1373
          %v1406 = vpack.c.b16 %v1374, %v1374
          %v1407 = vpack.c.b16 %v1375, %v1375
          %v1408 = vpack.c.b16 %v1376, %v1376
          %v1409 = vpack.c.b16 %v1377, %v1377
          %v1410 = vpack.c.b16 %v1378, %v1378
          %v1411 = vpack.c.b16 %v1379, %v1379
          %v1412 = vpack.c.b16 %v1380, %v1380
          %v1413 = vpack.c.b16 %v1381, %v1381
          %v1414 = vpack.c.b16 %v1382, %v1382
          %v1415 = vpack.c.b16 %v1383, %v1383
          %v1416 = vpack.c.b16 %v1384, %v1384
          %v1417 = vpack.c.b16 %v1385, %v1385
          %v1418 = vpack.c.b16 %v1386, %v1386
          %v1419 = vpack.c.b16 %v1387, %v1387
          %v1420 = vpack.c.b16 %v1388, %v1388
          %v1421 = vpack.c.b16 %v1389, %v1389
          %v1422 = vpack.c.b16 %v1390, %v1390
          %v1423 = vpack.c.b16 %v1391, %v1391
          %v1424 = vpack.c.b16 %v1392, %v1392
          %v1425 = vpack.c.b16 %v1393, %v1393
          %v1426 = vpack.c.b16 %v1394, %v1394
          %v1427 = vpack.c.b16 %v1395, %v1395
          %vm1460 = vcmask 519168
          %1461 = vst.msk [vmem:[%s309] sm:$0xf] %vm1460, %v1396
          %1462 = vst.msk [vmem:[%s309 + $0x4] sm:$0xf] %vm1460, %v1397
          %1463 = vst.msk [vmem:[%s309 + $0x8] sm:$0xf] %vm1460, %v1398
          %1464 = vst.msk [vmem:[%s309 + $0xc] sm:$0xf] %vm1460, %v1399
          %1465 = vst.msk [vmem:[%s309 + $0x10] sm:$0xf] %vm1460, %v1400
          %1466 = vst.msk [vmem:[%s309 + $0x14] sm:$0xf] %vm1460, %v1401
          %1467 = vst.msk [vmem:[%s309 + $0x18] sm:$0xf] %vm1460, %v1402
          %1468 = vst.msk [vmem:[%s309 + $0x1c] sm:$0xf] %vm1460, %v1403
          %1469 = vst.msk [vmem:[%s309 + $0x20] sm:$0xf] %vm1460, %v1404
          %1470 = vst.msk [vmem:[%s309 + $0x24] sm:$0xf] %vm1460, %v1405
          %1471 = vst.msk [vmem:[%s309 + $0x28] sm:$0xf] %vm1460, %v1406
          %1472 = vst.msk [vmem:[%s309 + $0x2c] sm:$0xf] %vm1460, %v1407
          %1473 = vst.msk [vmem:[%s309 + $0x30] sm:$0xf] %vm1460, %v1408
          %1474 = vst.msk [vmem:[%s309 + $0x34] sm:$0xf] %vm1460, %v1409
          %1475 = vst.msk [vmem:[%s309 + $0x38] sm:$0xf] %vm1460, %v1410
          %1476 = vst.msk [vmem:[%s309 + $0x3c] sm:$0xf] %vm1460, %v1411
          %1477 = vst.msk [vmem:[%s309 + $0x40] sm:$0xf] %vm1460, %v1412
          %1478 = vst.msk [vmem:[%s309 + $0x44] sm:$0xf] %vm1460, %v1413
          %1479 = vst.msk [vmem:[%s309 + $0x48] sm:$0xf] %vm1460, %v1414
          %1480 = vst.msk [vmem:[%s309 + $0x4c] sm:$0xf] %vm1460, %v1415
          %1481 = vst.msk [vmem:[%s309 + $0x50] sm:$0xf] %vm1460, %v1416
          %1482 = vst.msk [vmem:[%s309 + $0x54] sm:$0xf] %vm1460, %v1417
          %1483 = vst.msk [vmem:[%s309 + $0x58] sm:$0xf] %vm1460, %v1418
          %1484 = vst.msk [vmem:[%s309 + $0x5c] sm:$0xf] %vm1460, %v1419
          %1485 = vst.msk [vmem:[%s309 + $0x60] sm:$0xf] %vm1460, %v1420
          %1486 = vst.msk [vmem:[%s309 + $0x64] sm:$0xf] %vm1460, %v1421
          %1487 = vst.msk [vmem:[%s309 + $0x68] sm:$0xf] %vm1460, %v1422
          %1488 = vst.msk [vmem:[%s309 + $0x6c] sm:$0xf] %vm1460, %v1423
          %1489 = vst.msk [vmem:[%s309 + $0x70] sm:$0xf] %vm1460, %v1424
          %1490 = vst.msk [vmem:[%s309 + $0x74] sm:$0xf] %vm1460, %v1425
          %1491 = vst.msk [vmem:[%s309 + $0x78] sm:$0xf] %vm1460, %v1426
          %1492 = vst.msk [vmem:[%s309 + $0x7c] sm:$0xf] %vm1460, %v1427
          %1525 = vrot.lane.b32.xlu0 %v1076, 64
          %v1526 = vpop.permute.xlu0 %1525
          %1527 = vrot.lane.b32.xlu0 %v1077, 64
          %v1528 = vpop.permute.xlu0 %1527
          %1529 = vrot.lane.b32.xlu0 %v1078, 64
          %v1530 = vpop.permute.xlu0 %1529
          %1531 = vrot.lane.b32.xlu0 %v1079, 64
          %v1532 = vpop.permute.xlu0 %1531
          %1533 = vrot.lane.b32.xlu0 %v1080, 64
          %v1534 = vpop.permute.xlu0 %1533
          %1535 = vrot.lane.b32.xlu0 %v1081, 64
          %v1536 = vpop.permute.xlu0 %1535
          %1537 = vrot.lane.b32.xlu0 %v1082, 64
          %v1538 = vpop.permute.xlu0 %1537
          %1539 = vrot.lane.b32.xlu0 %v1083, 64
          %v1540 = vpop.permute.xlu0 %1539
          %1541 = vrot.lane.b32.xlu0 %v1084, 64
          %v1542 = vpop.permute.xlu0 %1541
          %1543 = vrot.lane.b32.xlu0 %v1085, 64
          %v1544 = vpop.permute.xlu0 %1543
          %1545 = vrot.lane.b32.xlu0 %v1086, 64
          %v1546 = vpop.permute.xlu0 %1545
          %1547 = vrot.lane.b32.xlu0 %v1087, 64
          %v1548 = vpop.permute.xlu0 %1547
          %1549 = vrot.lane.b32.xlu0 %v1088, 64
          %v1550 = vpop.permute.xlu0 %1549
          %1551 = vrot.lane.b32.xlu0 %v1089, 64
          %v1552 = vpop.permute.xlu0 %1551
          %1553 = vrot.lane.b32.xlu0 %v1090, 64
          %v1554 = vpop.permute.xlu0 %1553
          %1555 = vrot.lane.b32.xlu0 %v1091, 64
          %v1556 = vpop.permute.xlu0 %1555
          %1557 = vrot.lane.b32.xlu0 %v1092, 64
          %v1558 = vpop.permute.xlu0 %1557
          %1559 = vrot.lane.b32.xlu0 %v1093, 64
          %v1560 = vpop.permute.xlu0 %1559
          %1561 = vrot.lane.b32.xlu0 %v1094, 64
          %v1562 = vpop.permute.xlu0 %1561
          %1563 = vrot.lane.b32.xlu0 %v1095, 64
          %v1564 = vpop.permute.xlu0 %1563
          %1565 = vrot.lane.b32.xlu0 %v1096, 64
          %v1566 = vpop.permute.xlu0 %1565
          %1567 = vrot.lane.b32.xlu0 %v1097, 64
          %v1568 = vpop.permute.xlu0 %1567
          %1569 = vrot.lane.b32.xlu0 %v1098, 64
          %v1570 = vpop.permute.xlu0 %1569
          %1571 = vrot.lane.b32.xlu0 %v1099, 64
          %v1572 = vpop.permute.xlu0 %1571
          %1573 = vrot.lane.b32.xlu0 %v1100, 64
          %v1574 = vpop.permute.xlu0 %1573
          %1575 = vrot.lane.b32.xlu0 %v1101, 64
          %v1576 = vpop.permute.xlu0 %1575
          %1577 = vrot.lane.b32.xlu0 %v1102, 64
          %v1578 = vpop.permute.xlu0 %1577
          %1579 = vrot.lane.b32.xlu0 %v1103, 64
          %v1580 = vpop.permute.xlu0 %1579
          %1581 = vrot.lane.b32.xlu0 %v1104, 64
          %v1582 = vpop.permute.xlu0 %1581
          %1583 = vrot.lane.b32.xlu0 %v1105, 64
          %v1584 = vpop.permute.xlu0 %1583
          %1585 = vrot.lane.b32.xlu0 %v1106, 64
          %v1586 = vpop.permute.xlu0 %1585
          %1587 = vrot.lane.b32.xlu0 %v1107, 64
          %v1588 = vpop.permute.xlu0 %1587
          %v1621 = vsel %vm945, %v1526, 0.0
          %1622 = vadd.xlane.f32.xlu0 %v1621
          %v1623 = vpop.xlane.xlu0 %1622
          %v1624 = vsel %vm945, %v1528, 0.0
          %1625 = vadd.xlane.f32.xlu0 %v1624
          %v1626 = vpop.xlane.xlu0 %1625
          %v1627 = vsel %vm945, %v1530, 0.0
          %1628 = vadd.xlane.f32.xlu0 %v1627
          %v1629 = vpop.xlane.xlu0 %1628
          %v1630 = vsel %vm945, %v1532, 0.0
          %1631 = vadd.xlane.f32.xlu0 %v1630
          %v1632 = vpop.xlane.xlu0 %1631
          %v1633 = vsel %vm945, %v1534, 0.0
          %1634 = vadd.xlane.f32.xlu0 %v1633
          %v1635 = vpop.xlane.xlu0 %1634
          %v1636 = vsel %vm945, %v1536, 0.0
          %1637 = vadd.xlane.f32.xlu0 %v1636
          %v1638 = vpop.xlane.xlu0 %1637
          %v1639 = vsel %vm945, %v1538, 0.0
          %1640 = vadd.xlane.f32.xlu0 %v1639
          %v1641 = vpop.xlane.xlu0 %1640
          %v1642 = vsel %vm945, %v1540, 0.0
          %1643 = vadd.xlane.f32.xlu0 %v1642
          %v1644 = vpop.xlane.xlu0 %1643
          %v1645 = vsel %vm945, %v1542, 0.0
          %1646 = vadd.xlane.f32.xlu0 %v1645
          %v1647 = vpop.xlane.xlu0 %1646
          %v1648 = vsel %vm945, %v1544, 0.0
          %1649 = vadd.xlane.f32.xlu0 %v1648
          %v1650 = vpop.xlane.xlu0 %1649
          %v1651 = vsel %vm945, %v1546, 0.0
          %1652 = vadd.xlane.f32.xlu0 %v1651
          %v1653 = vpop.xlane.xlu0 %1652
          %v1654 = vsel %vm945, %v1548, 0.0
          %1655 = vadd.xlane.f32.xlu0 %v1654
          %v1656 = vpop.xlane.xlu0 %1655
          %v1657 = vsel %vm945, %v1550, 0.0
          %1658 = vadd.xlane.f32.xlu0 %v1657
          %v1659 = vpop.xlane.xlu0 %1658
          %v1660 = vsel %vm945, %v1552, 0.0
          %1661 = vadd.xlane.f32.xlu0 %v1660
          %v1662 = vpop.xlane.xlu0 %1661
          %v1663 = vsel %vm945, %v1554, 0.0
          %1664 = vadd.xlane.f32.xlu0 %v1663
          %v1665 = vpop.xlane.xlu0 %1664
          %v1666 = vsel %vm945, %v1556, 0.0
          %1667 = vadd.xlane.f32.xlu0 %v1666
          %v1668 = vpop.xlane.xlu0 %1667
          %v1669 = vsel %vm945, %v1558, 0.0
          %1670 = vadd.xlane.f32.xlu0 %v1669
          %v1671 = vpop.xlane.xlu0 %1670
          %v1672 = vsel %vm945, %v1560, 0.0
          %1673 = vadd.xlane.f32.xlu0 %v1672
          %v1674 = vpop.xlane.xlu0 %1673
          %v1675 = vsel %vm945, %v1562, 0.0
          %1676 = vadd.xlane.f32.xlu0 %v1675
          %v1677 = vpop.xlane.xlu0 %1676
          %v1678 = vsel %vm945, %v1564, 0.0
          %1679 = vadd.xlane.f32.xlu0 %v1678
          %v1680 = vpop.xlane.xlu0 %1679
          %v1681 = vsel %vm945, %v1566, 0.0
          %1682 = vadd.xlane.f32.xlu0 %v1681
          %v1683 = vpop.xlane.xlu0 %1682
          %v1684 = vsel %vm945, %v1568, 0.0
          %1685 = vadd.xlane.f32.xlu0 %v1684
          %v1686 = vpop.xlane.xlu0 %1685
          %v1687 = vsel %vm945, %v1570, 0.0
          %1688 = vadd.xlane.f32.xlu0 %v1687
          %v1689 = vpop.xlane.xlu0 %1688
          %v1690 = vsel %vm945, %v1572, 0.0
          %1691 = vadd.xlane.f32.xlu0 %v1690
          %v1692 = vpop.xlane.xlu0 %1691
          %v1693 = vsel %vm945, %v1574, 0.0
          %1694 = vadd.xlane.f32.xlu0 %v1693
          %v1695 = vpop.xlane.xlu0 %1694
          %v1696 = vsel %vm945, %v1576, 0.0
          %1697 = vadd.xlane.f32.xlu0 %v1696
          %v1698 = vpop.xlane.xlu0 %1697
          %v1699 = vsel %vm945, %v1578, 0.0
          %1700 = vadd.xlane.f32.xlu0 %v1699
          %v1701 = vpop.xlane.xlu0 %1700
          %v1702 = vsel %vm945, %v1580, 0.0
          %1703 = vadd.xlane.f32.xlu0 %v1702
          %v1704 = vpop.xlane.xlu0 %1703
          %v1705 = vsel %vm945, %v1582, 0.0
          %1706 = vadd.xlane.f32.xlu0 %v1705
          %v1707 = vpop.xlane.xlu0 %1706
          %v1708 = vsel %vm945, %v1584, 0.0
          %1709 = vadd.xlane.f32.xlu0 %v1708
          %v1710 = vpop.xlane.xlu0 %1709
          %v1711 = vsel %vm945, %v1586, 0.0
          %1712 = vadd.xlane.f32.xlu0 %v1711
          %v1713 = vpop.xlane.xlu0 %1712
          %v1714 = vsel %vm945, %v1588, 0.0
          %1715 = vadd.xlane.f32.xlu0 %v1714
          %v1716 = vpop.xlane.xlu0 %1715
          %v1717 = vmax.f32 %v1623, 1e-24
          %v1718 = vmax.f32 %v1626, 1e-24
          %v1719 = vmax.f32 %v1629, 1e-24
          %v1720 = vmax.f32 %v1632, 1e-24
          %v1721 = vmax.f32 %v1635, 1e-24
          %v1722 = vmax.f32 %v1638, 1e-24
          %v1723 = vmax.f32 %v1641, 1e-24
          %v1724 = vmax.f32 %v1644, 1e-24
          %v1725 = vmax.f32 %v1647, 1e-24
          %v1726 = vmax.f32 %v1650, 1e-24
          %v1727 = vmax.f32 %v1653, 1e-24
          %v1728 = vmax.f32 %v1656, 1e-24
          %v1729 = vmax.f32 %v1659, 1e-24
          %v1730 = vmax.f32 %v1662, 1e-24
          %v1731 = vmax.f32 %v1665, 1e-24
          %v1732 = vmax.f32 %v1668, 1e-24
          %v1733 = vmax.f32 %v1671, 1e-24
          %v1734 = vmax.f32 %v1674, 1e-24
          %v1735 = vmax.f32 %v1677, 1e-24
          %v1736 = vmax.f32 %v1680, 1e-24
          %v1737 = vmax.f32 %v1683, 1e-24
          %v1738 = vmax.f32 %v1686, 1e-24
          %v1739 = vmax.f32 %v1689, 1e-24
          %v1740 = vmax.f32 %v1692, 1e-24
          %v1741 = vmax.f32 %v1695, 1e-24
          %v1742 = vmax.f32 %v1698, 1e-24
          %v1743 = vmax.f32 %v1701, 1e-24
          %v1744 = vmax.f32 %v1704, 1e-24
          %v1745 = vmax.f32 %v1707, 1e-24
          %v1746 = vmax.f32 %v1710, 1e-24
          %v1747 = vmax.f32 %v1713, 1e-24
          %v1748 = vmax.f32 %v1716, 1e-24
          %v1749 = vrsqrt.pop %v1717
          %v1750 = vrsqrt.pop %v1718
          %v1751 = vrsqrt.pop %v1719
          %v1752 = vrsqrt.pop %v1720
          %v1753 = vrsqrt.pop %v1721
          %v1754 = vrsqrt.pop %v1722
          %v1755 = vrsqrt.pop %v1723
          %v1756 = vrsqrt.pop %v1724
          %v1757 = vrsqrt.pop %v1725
          %v1758 = vrsqrt.pop %v1726
          %v1759 = vrsqrt.pop %v1727
          %v1760 = vrsqrt.pop %v1728
          %v1761 = vrsqrt.pop %v1729
          %v1762 = vrsqrt.pop %v1730
          %v1763 = vrsqrt.pop %v1731
          %v1764 = vrsqrt.pop %v1732
          %v1765 = vrsqrt.pop %v1733
          %v1766 = vrsqrt.pop %v1734
          %v1767 = vrsqrt.pop %v1735
          %v1768 = vrsqrt.pop %v1736
          %v1769 = vrsqrt.pop %v1737
          %v1770 = vrsqrt.pop %v1738
          %v1771 = vrsqrt.pop %v1739
          %v1772 = vrsqrt.pop %v1740
          %v1773 = vrsqrt.pop %v1741
          %v1774 = vrsqrt.pop %v1742
          %v1775 = vrsqrt.pop %v1743
          %v1776 = vrsqrt.pop %v1744
          %v1777 = vrsqrt.pop %v1745
          %v1778 = vrsqrt.pop %v1746
          %v1779 = vrsqrt.pop %v1747
          %v1780 = vrsqrt.pop %v1748
          %v1781 = vmul.f32 %v1012, %v1749
          %v1782 = vmul.f32 %v1014, %v1750
          %v1783 = vmul.f32 %v1016, %v1751
          %v1784 = vmul.f32 %v1018, %v1752
          %v1785 = vmul.f32 %v1020, %v1753
          %v1786 = vmul.f32 %v1022, %v1754
          %v1787 = vmul.f32 %v1024, %v1755
          %v1788 = vmul.f32 %v1026, %v1756
          %v1789 = vmul.f32 %v1028, %v1757
          %v1790 = vmul.f32 %v1030, %v1758
          %v1791 = vmul.f32 %v1032, %v1759
          %v1792 = vmul.f32 %v1034, %v1760
          %v1793 = vmul.f32 %v1036, %v1761
          %v1794 = vmul.f32 %v1038, %v1762
          %v1795 = vmul.f32 %v1040, %v1763
          %v1796 = vmul.f32 %v1042, %v1764
          %v1797 = vmul.f32 %v1044, %v1765
          %v1798 = vmul.f32 %v1046, %v1766
          %v1799 = vmul.f32 %v1048, %v1767
          %v1800 = vmul.f32 %v1050, %v1768
          %v1801 = vmul.f32 %v1052, %v1769
          %v1802 = vmul.f32 %v1054, %v1770
          %v1803 = vmul.f32 %v1056, %v1771
          %v1804 = vmul.f32 %v1058, %v1772
          %v1805 = vmul.f32 %v1060, %v1773
          %v1806 = vmul.f32 %v1062, %v1774
          %v1807 = vmul.f32 %v1064, %v1775
          %v1808 = vmul.f32 %v1066, %v1776
          %v1809 = vmul.f32 %v1068, %v1777
          %v1810 = vmul.f32 %v1070, %v1778
          %v1811 = vmul.f32 %v1072, %v1779
          %v1812 = vmul.f32 %v1074, %v1780
          %v1813 = vpack.c.bf16 %v1782, %v1781
          %v1814 = vpack.c.bf16 %v1784, %v1783
          %v1815 = vpack.c.bf16 %v1786, %v1785
          %v1816 = vpack.c.bf16 %v1788, %v1787
          %v1817 = vpack.c.bf16 %v1790, %v1789
          %v1818 = vpack.c.bf16 %v1792, %v1791
          %v1819 = vpack.c.bf16 %v1794, %v1793
          %v1820 = vpack.c.bf16 %v1796, %v1795
          %v1821 = vpack.c.bf16 %v1798, %v1797
          %v1822 = vpack.c.bf16 %v1800, %v1799
          %v1823 = vpack.c.bf16 %v1802, %v1801
          %v1824 = vpack.c.bf16 %v1804, %v1803
          %v1825 = vpack.c.bf16 %v1806, %v1805
          %v1826 = vpack.c.bf16 %v1808, %v1807
          %v1827 = vpack.c.bf16 %v1810, %v1809
          %v1828 = vpack.c.bf16 %v1812, %v1811
          %v1845 = vunpack.c.l.b16 %v1813
          %v1846 = vunpack.c.h.b16 %v1813
          %v1847 = vunpack.c.l.b16 %v1814
          %v1848 = vunpack.c.h.b16 %v1814
          %v1849 = vunpack.c.l.b16 %v1815
          %v1850 = vunpack.c.h.b16 %v1815
          %v1851 = vunpack.c.l.b16 %v1816
          %v1852 = vunpack.c.h.b16 %v1816
          %v1853 = vunpack.c.l.b16 %v1817
          %v1854 = vunpack.c.h.b16 %v1817
          %v1855 = vunpack.c.l.b16 %v1818
          %v1856 = vunpack.c.h.b16 %v1818
          %v1857 = vunpack.c.l.b16 %v1819
          %v1858 = vunpack.c.h.b16 %v1819
          %v1859 = vunpack.c.l.b16 %v1820
          %v1860 = vunpack.c.h.b16 %v1820
          %v1861 = vunpack.c.l.b16 %v1821
          %v1862 = vunpack.c.h.b16 %v1821
          %v1863 = vunpack.c.l.b16 %v1822
          %v1864 = vunpack.c.h.b16 %v1822
          %v1865 = vunpack.c.l.b16 %v1823
          %v1866 = vunpack.c.h.b16 %v1823
          %v1867 = vunpack.c.l.b16 %v1824
          %v1868 = vunpack.c.h.b16 %v1824
          %v1869 = vunpack.c.l.b16 %v1825
          %v1870 = vunpack.c.h.b16 %v1825
          %v1871 = vunpack.c.l.b16 %v1826
          %v1872 = vunpack.c.h.b16 %v1826
          %v1873 = vunpack.c.l.b16 %v1827
          %v1874 = vunpack.c.h.b16 %v1827
          %v1875 = vunpack.c.l.b16 %v1828
          %v1876 = vunpack.c.h.b16 %v1828
          %v1877 = vpack.c.b16 %v1845, %v1845
          %v1878 = vpack.c.b16 %v1846, %v1846
          %v1879 = vpack.c.b16 %v1847, %v1847
          %v1880 = vpack.c.b16 %v1848, %v1848
          %v1881 = vpack.c.b16 %v1849, %v1849
          %v1882 = vpack.c.b16 %v1850, %v1850
          %v1883 = vpack.c.b16 %v1851, %v1851
          %v1884 = vpack.c.b16 %v1852, %v1852
          %v1885 = vpack.c.b16 %v1853, %v1853
          %v1886 = vpack.c.b16 %v1854, %v1854
          %v1887 = vpack.c.b16 %v1855, %v1855
          %v1888 = vpack.c.b16 %v1856, %v1856
          %v1889 = vpack.c.b16 %v1857, %v1857
          %v1890 = vpack.c.b16 %v1858, %v1858
          %v1891 = vpack.c.b16 %v1859, %v1859
          %v1892 = vpack.c.b16 %v1860, %v1860
          %v1893 = vpack.c.b16 %v1861, %v1861
          %v1894 = vpack.c.b16 %v1862, %v1862
          %v1895 = vpack.c.b16 %v1863, %v1863
          %v1896 = vpack.c.b16 %v1864, %v1864
          %v1897 = vpack.c.b16 %v1865, %v1865
          %v1898 = vpack.c.b16 %v1866, %v1866
          %v1899 = vpack.c.b16 %v1867, %v1867
          %v1900 = vpack.c.b16 %v1868, %v1868
          %v1901 = vpack.c.b16 %v1869, %v1869
          %v1902 = vpack.c.b16 %v1870, %v1870
          %v1903 = vpack.c.b16 %v1871, %v1871
          %v1904 = vpack.c.b16 %v1872, %v1872
          %v1905 = vpack.c.b16 %v1873, %v1873
          %v1906 = vpack.c.b16 %v1874, %v1874
          %v1907 = vpack.c.b16 %v1875, %v1875
          %v1908 = vpack.c.b16 %v1876, %v1876
          %1909 = vrot.lane.b32.xlu0 %v1877, 64
          %v1910 = vpop.permute.xlu0 %1909
          %1911 = vrot.lane.b32.xlu0 %v1878, 64
          %v1912 = vpop.permute.xlu0 %1911
          %1913 = vrot.lane.b32.xlu0 %v1879, 64
          %v1914 = vpop.permute.xlu0 %1913
          %1915 = vrot.lane.b32.xlu0 %v1880, 64
          %v1916 = vpop.permute.xlu0 %1915
          %1917 = vrot.lane.b32.xlu0 %v1881, 64
          %v1918 = vpop.permute.xlu0 %1917
          %1919 = vrot.lane.b32.xlu0 %v1882, 64
          %v1920 = vpop.permute.xlu0 %1919
          %1921 = vrot.lane.b32.xlu0 %v1883, 64
          %v1922 = vpop.permute.xlu0 %1921
          %1923 = vrot.lane.b32.xlu0 %v1884, 64
          %v1924 = vpop.permute.xlu0 %1923
          %1925 = vrot.lane.b32.xlu0 %v1885, 64
          %v1926 = vpop.permute.xlu0 %1925
          %1927 = vrot.lane.b32.xlu0 %v1886, 64
          %v1928 = vpop.permute.xlu0 %1927
          %1929 = vrot.lane.b32.xlu0 %v1887, 64
          %v1930 = vpop.permute.xlu0 %1929
          %1931 = vrot.lane.b32.xlu0 %v1888, 64
          %v1932 = vpop.permute.xlu0 %1931
          %1933 = vrot.lane.b32.xlu0 %v1889, 64
          %v1934 = vpop.permute.xlu0 %1933
          %1935 = vrot.lane.b32.xlu0 %v1890, 64
          %v1936 = vpop.permute.xlu0 %1935
          %1937 = vrot.lane.b32.xlu0 %v1891, 64
          %v1938 = vpop.permute.xlu0 %1937
          %1939 = vrot.lane.b32.xlu0 %v1892, 64
          %v1940 = vpop.permute.xlu0 %1939
          %1941 = vrot.lane.b32.xlu0 %v1893, 64
          %v1942 = vpop.permute.xlu0 %1941
          %1943 = vrot.lane.b32.xlu0 %v1894, 64
          %v1944 = vpop.permute.xlu0 %1943
          %1945 = vrot.lane.b32.xlu0 %v1895, 64
          %v1946 = vpop.permute.xlu0 %1945
          %1947 = vrot.lane.b32.xlu0 %v1896, 64
          %v1948 = vpop.permute.xlu0 %1947
          %1949 = vrot.lane.b32.xlu0 %v1897, 64
          %v1950 = vpop.permute.xlu0 %1949
          %1951 = vrot.lane.b32.xlu0 %v1898, 64
          %v1952 = vpop.permute.xlu0 %1951
          %1953 = vrot.lane.b32.xlu0 %v1899, 64
          %v1954 = vpop.permute.xlu0 %1953
          %1955 = vrot.lane.b32.xlu0 %v1900, 64
          %v1956 = vpop.permute.xlu0 %1955
          %1957 = vrot.lane.b32.xlu0 %v1901, 64
          %v1958 = vpop.permute.xlu0 %1957
          %1959 = vrot.lane.b32.xlu0 %v1902, 64
          %v1960 = vpop.permute.xlu0 %1959
          %1961 = vrot.lane.b32.xlu0 %v1903, 64
          %v1962 = vpop.permute.xlu0 %1961
          %1963 = vrot.lane.b32.xlu0 %v1904, 64
          %v1964 = vpop.permute.xlu0 %1963
          %1965 = vrot.lane.b32.xlu0 %v1905, 64
          %v1966 = vpop.permute.xlu0 %1965
          %1967 = vrot.lane.b32.xlu0 %v1906, 64
          %v1968 = vpop.permute.xlu0 %1967
          %1969 = vrot.lane.b32.xlu0 %v1907, 64
          %v1970 = vpop.permute.xlu0 %1969
          %1971 = vrot.lane.b32.xlu0 %v1908, 64
          %v1972 = vpop.permute.xlu0 %1971
          %2005 = vst.msk [vmem:[%s316] sm:$0xf] %vm1460, %v1910
          %2006 = vst.msk [vmem:[%s316 + $0x4] sm:$0xf] %vm1460, %v1912
          %2007 = vst.msk [vmem:[%s316 + $0x8] sm:$0xf] %vm1460, %v1914
          %2008 = vst.msk [vmem:[%s316 + $0xc] sm:$0xf] %vm1460, %v1916
          %2009 = vst.msk [vmem:[%s316 + $0x10] sm:$0xf] %vm1460, %v1918
          %2010 = vst.msk [vmem:[%s316 + $0x14] sm:$0xf] %vm1460, %v1920
          %2011 = vst.msk [vmem:[%s316 + $0x18] sm:$0xf] %vm1460, %v1922
          %2012 = vst.msk [vmem:[%s316 + $0x1c] sm:$0xf] %vm1460, %v1924
          %2013 = vst.msk [vmem:[%s316 + $0x20] sm:$0xf] %vm1460, %v1926
          %2014 = vst.msk [vmem:[%s316 + $0x24] sm:$0xf] %vm1460, %v1928
          %2015 = vst.msk [vmem:[%s316 + $0x28] sm:$0xf] %vm1460, %v1930
          %2016 = vst.msk [vmem:[%s316 + $0x2c] sm:$0xf] %vm1460, %v1932
          %2017 = vst.msk [vmem:[%s316 + $0x30] sm:$0xf] %vm1460, %v1934
          %2018 = vst.msk [vmem:[%s316 + $0x34] sm:$0xf] %vm1460, %v1936
          %2019 = vst.msk [vmem:[%s316 + $0x38] sm:$0xf] %vm1460, %v1938
          %2020 = vst.msk [vmem:[%s316 + $0x3c] sm:$0xf] %vm1460, %v1940
          %2021 = vst.msk [vmem:[%s316 + $0x40] sm:$0xf] %vm1460, %v1942
          %2022 = vst.msk [vmem:[%s316 + $0x44] sm:$0xf] %vm1460, %v1944
          %2023 = vst.msk [vmem:[%s316 + $0x48] sm:$0xf] %vm1460, %v1946
          %2024 = vst.msk [vmem:[%s316 + $0x4c] sm:$0xf] %vm1460, %v1948
          %2025 = vst.msk [vmem:[%s316 + $0x50] sm:$0xf] %vm1460, %v1950
          %2026 = vst.msk [vmem:[%s316 + $0x54] sm:$0xf] %vm1460, %v1952
          %2027 = vst.msk [vmem:[%s316 + $0x58] sm:$0xf] %vm1460, %v1954
          %2028 = vst.msk [vmem:[%s316 + $0x5c] sm:$0xf] %vm1460, %v1956
          %2029 = vst.msk [vmem:[%s316 + $0x60] sm:$0xf] %vm1460, %v1958
          %2030 = vst.msk [vmem:[%s316 + $0x64] sm:$0xf] %vm1460, %v1960
          %2031 = vst.msk [vmem:[%s316 + $0x68] sm:$0xf] %vm1460, %v1962
          %2032 = vst.msk [vmem:[%s316 + $0x6c] sm:$0xf] %vm1460, %v1964
          %2033 = vst.msk [vmem:[%s316 + $0x70] sm:$0xf] %vm1460, %v1966
          %2034 = vst.msk [vmem:[%s316 + $0x74] sm:$0xf] %vm1460, %v1968
          %2035 = vst.msk [vmem:[%s316 + $0x78] sm:$0xf] %vm1460, %v1970
          %2036 = vst.msk [vmem:[%s316 + $0x7c] sm:$0xf] %vm1460, %v1972
          %v2037 = vpack.c.bf16 %v1015, %v1013
          %v2038 = vpack.c.bf16 %v1019, %v1017
          %v2039 = vpack.c.bf16 %v1023, %v1021
          %v2040 = vpack.c.bf16 %v1027, %v1025
          %v2041 = vpack.c.bf16 %v1031, %v1029
          %v2042 = vpack.c.bf16 %v1035, %v1033
          %v2043 = vpack.c.bf16 %v1039, %v1037
          %v2044 = vpack.c.bf16 %v1043, %v1041
          %v2045 = vpack.c.bf16 %v1047, %v1045
          %v2046 = vpack.c.bf16 %v1051, %v1049
          %v2047 = vpack.c.bf16 %v1055, %v1053
          %v2048 = vpack.c.bf16 %v1059, %v1057
          %v2049 = vpack.c.bf16 %v1063, %v1061
          %v2050 = vpack.c.bf16 %v1067, %v1065
          %v2051 = vpack.c.bf16 %v1071, %v1069
          %v2052 = vpack.c.bf16 %v1075, %v1073
          %v2069 = vunpack.c.l.b16 %v2037
          %v2070 = vunpack.c.h.b16 %v2037
          %v2071 = vunpack.c.l.b16 %v2038
          %v2072 = vunpack.c.h.b16 %v2038
          %v2073 = vunpack.c.l.b16 %v2039
          %v2074 = vunpack.c.h.b16 %v2039
          %v2075 = vunpack.c.l.b16 %v2040
          %v2076 = vunpack.c.h.b16 %v2040
          %v2077 = vunpack.c.l.b16 %v2041
          %v2078 = vunpack.c.h.b16 %v2041
          %v2079 = vunpack.c.l.b16 %v2042
          %v2080 = vunpack.c.h.b16 %v2042
          %v2081 = vunpack.c.l.b16 %v2043
          %v2082 = vunpack.c.h.b16 %v2043
          %v2083 = vunpack.c.l.b16 %v2044
          %v2084 = vunpack.c.h.b16 %v2044
          %v2085 = vunpack.c.l.b16 %v2045
          %v2086 = vunpack.c.h.b16 %v2045
          %v2087 = vunpack.c.l.b16 %v2046
          %v2088 = vunpack.c.h.b16 %v2046
          %v2089 = vunpack.c.l.b16 %v2047
          %v2090 = vunpack.c.h.b16 %v2047
          %v2091 = vunpack.c.l.b16 %v2048
          %v2092 = vunpack.c.h.b16 %v2048
          %v2093 = vunpack.c.l.b16 %v2049
          %v2094 = vunpack.c.h.b16 %v2049
          %v2095 = vunpack.c.l.b16 %v2050
          %v2096 = vunpack.c.h.b16 %v2050
          %v2097 = vunpack.c.l.b16 %v2051
          %v2098 = vunpack.c.h.b16 %v2051
          %v2099 = vunpack.c.l.b16 %v2052
          %v2100 = vunpack.c.h.b16 %v2052
          %v2101 = vpack.c.b16 %v2069, %v2069
          %v2102 = vpack.c.b16 %v2070, %v2070
          %v2103 = vpack.c.b16 %v2071, %v2071
          %v2104 = vpack.c.b16 %v2072, %v2072
          %v2105 = vpack.c.b16 %v2073, %v2073
          %v2106 = vpack.c.b16 %v2074, %v2074
          %v2107 = vpack.c.b16 %v2075, %v2075
          %v2108 = vpack.c.b16 %v2076, %v2076
          %v2109 = vpack.c.b16 %v2077, %v2077
          %v2110 = vpack.c.b16 %v2078, %v2078
          %v2111 = vpack.c.b16 %v2079, %v2079
          %v2112 = vpack.c.b16 %v2080, %v2080
          %v2113 = vpack.c.b16 %v2081, %v2081
          %v2114 = vpack.c.b16 %v2082, %v2082
          %v2115 = vpack.c.b16 %v2083, %v2083
          %v2116 = vpack.c.b16 %v2084, %v2084
          %v2117 = vpack.c.b16 %v2085, %v2085
          %v2118 = vpack.c.b16 %v2086, %v2086
          %v2119 = vpack.c.b16 %v2087, %v2087
          %v2120 = vpack.c.b16 %v2088, %v2088
          %v2121 = vpack.c.b16 %v2089, %v2089
          %v2122 = vpack.c.b16 %v2090, %v2090
          %v2123 = vpack.c.b16 %v2091, %v2091
          %v2124 = vpack.c.b16 %v2092, %v2092
          %v2125 = vpack.c.b16 %v2093, %v2093
          %v2126 = vpack.c.b16 %v2094, %v2094
          %v2127 = vpack.c.b16 %v2095, %v2095
          %v2128 = vpack.c.b16 %v2096, %v2096
          %v2129 = vpack.c.b16 %v2097, %v2097
          %v2130 = vpack.c.b16 %v2098, %v2098
          %v2131 = vpack.c.b16 %v2099, %v2099
          %v2132 = vpack.c.b16 %v2100, %v2100
          %2165 = vst.msk [vmem:[%s323] sm:$0xf] %vm1460, %v2101
          %2166 = vst.msk [vmem:[%s323 + $0x4] sm:$0xf] %vm1460, %v2102
          %2167 = vst.msk [vmem:[%s323 + $0x8] sm:$0xf] %vm1460, %v2103
          %2168 = vst.msk [vmem:[%s323 + $0xc] sm:$0xf] %vm1460, %v2104
          %2169 = vst.msk [vmem:[%s323 + $0x10] sm:$0xf] %vm1460, %v2105
          %2170 = vst.msk [vmem:[%s323 + $0x14] sm:$0xf] %vm1460, %v2106
          %2171 = vst.msk [vmem:[%s323 + $0x18] sm:$0xf] %vm1460, %v2107
          %2172 = vst.msk [vmem:[%s323 + $0x1c] sm:$0xf] %vm1460, %v2108
          %2173 = vst.msk [vmem:[%s323 + $0x20] sm:$0xf] %vm1460, %v2109
          %2174 = vst.msk [vmem:[%s323 + $0x24] sm:$0xf] %vm1460, %v2110
          %2175 = vst.msk [vmem:[%s323 + $0x28] sm:$0xf] %vm1460, %v2111
          %2176 = vst.msk [vmem:[%s323 + $0x2c] sm:$0xf] %vm1460, %v2112
          %2177 = vst.msk [vmem:[%s323 + $0x30] sm:$0xf] %vm1460, %v2113
          %2178 = vst.msk [vmem:[%s323 + $0x34] sm:$0xf] %vm1460, %v2114
          %2179 = vst.msk [vmem:[%s323 + $0x38] sm:$0xf] %vm1460, %v2115
          %2180 = vst.msk [vmem:[%s323 + $0x3c] sm:$0xf] %vm1460, %v2116
          %2181 = vst.msk [vmem:[%s323 + $0x40] sm:$0xf] %vm1460, %v2117
          %2182 = vst.msk [vmem:[%s323 + $0x44] sm:$0xf] %vm1460, %v2118
          %2183 = vst.msk [vmem:[%s323 + $0x48] sm:$0xf] %vm1460, %v2119
          %2184 = vst.msk [vmem:[%s323 + $0x4c] sm:$0xf] %vm1460, %v2120
          %2185 = vst.msk [vmem:[%s323 + $0x50] sm:$0xf] %vm1460, %v2121
          %2186 = vst.msk [vmem:[%s323 + $0x54] sm:$0xf] %vm1460, %v2122
          %2187 = vst.msk [vmem:[%s323 + $0x58] sm:$0xf] %vm1460, %v2123
          %2188 = vst.msk [vmem:[%s323 + $0x5c] sm:$0xf] %vm1460, %v2124
          %2189 = vst.msk [vmem:[%s323 + $0x60] sm:$0xf] %vm1460, %v2125
          %2190 = vst.msk [vmem:[%s323 + $0x64] sm:$0xf] %vm1460, %v2126
          %2191 = vst.msk [vmem:[%s323 + $0x68] sm:$0xf] %vm1460, %v2127
          %2192 = vst.msk [vmem:[%s323 + $0x6c] sm:$0xf] %vm1460, %v2128
          %2193 = vst.msk [vmem:[%s323 + $0x70] sm:$0xf] %vm1460, %v2129
          %2194 = vst.msk [vmem:[%s323 + $0x74] sm:$0xf] %vm1460, %v2130
          %2195 = vst.msk [vmem:[%s323 + $0x78] sm:$0xf] %vm1460, %v2131
          %2196 = vst.msk [vmem:[%s323 + $0x7c] sm:$0xf] %vm1460, %v2132
        $region44: #{tpu_custom_call.1} parent=27 // pred_fallthru
          _
        %s2197 = sand.u32 %s124, 1
        %s2198 = scalar_lea.sflag [#allocation5], %s2197
        %s2199 = sand.u32 %s124, 1
        %s2200 = smul.addr %s2199, 128
        %s2201 = scalar_lea.vmem [#allocation8], %s2200
        %s2202 = sand.u32 %s28, 1
        %s2203 = scalar_lea.sflag [#allocation10], %s2202
        %s2204 = sand.u32 %s154, 1
        %s2205 = smul.addr %s2204, 128
        %s2206 = scalar_lea.vmem [#allocation9], %s2205
        %s2207 = sand.u32 %s28, 1
        %s2208 = scalar_lea.sflag [#allocation10], %s2207
        %s2209 = sand.u32 %s184, 1
        %s2210 = smul.addr %s2209, 128
        %s2211 = scalar_lea.vmem [#allocation11], %s2210
        // Predicated region
        $region45: #{tpu_custom_call.1} parent=27 // pred_check
          %p2212 = pneg %p134
        $region46: #{tpu_custom_call.1} parent=27 // pred_check_branch
          %2214 = sbr.rel (%p2212) target = $region48
        $region47: #{tpu_custom_call.1} parent=27 // pred_region
          %s2215 = smul.u32 32, %s36
          %s2217 = ssub.s32 2048, 2048
          %2218 = vsyncadd %s2198, %s2217
          %s2219 = smul.addr %s35, 32
          %s2220 = sadd.s32 %s2215, %s2219
          %s2221 = smul.addr %s34, 64
          %s2222 = sadd.s32 %s2220, %s2221
          %s2223 = smul.addr %s2222, 64
          %s2224 = scalar_lea.hbm %s2, %s2223
          %s2225 = sshll.u32 %s2201, 4
          %s2226 = int_to_ptr.vmem [resolvable:$true] %s2225
          %2231 = dma.vmem_to_hbm [thread:$0]  %s2226, 2048, %s2224, %s2198, 64, 64, 4
        $region48: #{tpu_custom_call.1} parent=27 // pred_fallthru
          _
        // Predicated region
        $region49: #{tpu_custom_call.1} parent=27 // pred_check
          %p2232 = pneg %p164
        $region50: #{tpu_custom_call.1} parent=27 // pred_check_branch
          %2234 = sbr.rel (%p2232) target = $region52
        $region51: #{tpu_custom_call.1} parent=27 // pred_region
          %s2235 = smul.u32 32, %s36
          %s2237 = ssub.s32 2048, 2048
          %2238 = vsyncadd %s2203, %s2237
          %s2239 = smul.addr %s35, 32
          %s2240 = sadd.s32 %s2235, %s2239
          %s2241 = smul.addr %s34, 64
          %s2242 = sadd.s32 %s2240, %s2241
          %s2243 = smul.addr %s2242, 64
          %s2244 = scalar_lea.hbm %s3, %s2243
          %s2245 = sshll.u32 %s2206, 4
          %s2246 = int_to_ptr.vmem [resolvable:$true] %s2245
          %2251 = dma.vmem_to_hbm [thread:$0]  %s2246, 2048, %s2244, %s2203, 64, 64, 4
        $region52: #{tpu_custom_call.1} parent=27 // pred_fallthru
          _
        // Predicated region
        $region53: #{tpu_custom_call.1} parent=27 // pred_check
          %p2252 = pneg %p194
        $region54: #{tpu_custom_call.1} parent=27 // pred_check_branch
          %2254 = sbr.rel (%p2252) target = $region56
        $region55: #{tpu_custom_call.1} parent=27 // pred_region
          %s2255 = smul.u32 32, %s36
          %s2257 = ssub.s32 2048, 2048
          %2258 = vsyncadd %s2208, %s2257
          %s2259 = smul.addr %s35, 32
          %s2260 = sadd.s32 %s2255, %s2259
          %s2261 = smul.addr %s34, 64
          %s2262 = sadd.s32 %s2260, %s2261
          %s2263 = smul.addr %s2262, 64
          %s2264 = scalar_lea.hbm %s4, %s2263
          %s2265 = sshll.u32 %s2211, 4
          %s2266 = int_to_ptr.vmem [resolvable:$true] %s2265
          %2271 = dma.vmem_to_hbm [thread:$0]  %s2266, 2048, %s2264, %s2208, 64, 64, 4
        $region56: #{tpu_custom_call.1} parent=27 // pred_fallthru
          _
      $region28: #{tpu_custom_call.1} parent=5 // pred_fallthru
        _
      %p2272 = scmp.le.s32.totalorder 2, %s23
      // Predicated region
      $region57: #{tpu_custom_call.1} parent=5 // pred_check
        %p2273 = pneg %p2272
      $region58: #{tpu_custom_call.1} parent=5 // pred_check_branch
        %2275 = sbr.rel (%p2273) target = $region60
      $region59: #{tpu_custom_call.1} parent=5 // pred_region
        %s2276 = ssub.s32 %s23, 2
        // Predicated region
        $region61: #{tpu_custom_call.1} parent=59 // pred_check
          %p2277 = pneg %p140
        $region62: #{tpu_custom_call.1} parent=59 // pred_check_branch
          %2279 = sbr.rel (%p2277) target = $region64
        $region63: #{tpu_custom_call.1} parent=59 // pred_region
          %s2280 = sand.u32 %s125, 1
          %s2281 = scalar_lea.sflag [#allocation5], %s2280
          %s2282 = sand.u32 %s125, 1
          %s2283 = smul.addr %s2282, 128
          %s2284 = scalar_lea.vmem [#allocation8], %s2283
          %2285 = dma.done %s2281, 2048
        $region64: #{tpu_custom_call.1} parent=59 // pred_fallthru
          _
        // Predicated region
        $region65: #{tpu_custom_call.1} parent=59 // pred_check
          %p2286 = pneg %p170
        $region66: #{tpu_custom_call.1} parent=59 // pred_check_branch
          %2288 = sbr.rel (%p2286) target = $region68
        $region67: #{tpu_custom_call.1} parent=59 // pred_region
          %s2289 = sand.u32 %s29, 1
          %s2290 = scalar_lea.sflag [#allocation10], %s2289
          %s2291 = sand.u32 %s155, 1
          %s2292 = smul.addr %s2291, 128
          %s2293 = scalar_lea.vmem [#allocation9], %s2292
          %2294 = dma.done %s2290, 2048
        $region68: #{tpu_custom_call.1} parent=59 // pred_fallthru
          _
        // Predicated region
        $region69: #{tpu_custom_call.1} parent=59 // pred_check
          %p2295 = pneg %p200
        $region70: #{tpu_custom_call.1} parent=59 // pred_check_branch
          %2297 = sbr.rel (%p2295) target = $region72
        $region71: #{tpu_custom_call.1} parent=59 // pred_region
          %s2298 = sand.u32 %s29, 1
          %s2299 = scalar_lea.sflag [#allocation10], %s2298
          %s2300 = sand.u32 %s185, 1
          %s2301 = smul.addr %s2300, 128
          %s2302 = scalar_lea.vmem [#allocation11], %s2301
          %2303 = dma.done %s2299, 2048
        $region72: #{tpu_custom_call.1} parent=59 // pred_fallthru
          _
      $region60: #{tpu_custom_call.1} parent=5 // pred_fallthru
        _
    $region6: #{tpu_custom_call.1} parent=1 // loop_footer
      %s27 = sadd.s32 1, %s23
    $region7: #{tpu_custom_call.1} parent=1 // loop_footer_branch
      %22 = sbr.rel target = $region3
    $region8: #{tpu_custom_call.1} parent=1 // loop_exit
      _
    %2304 = vsyncpa [#allocation4], 1
    %s2305 = scalar_lea.sflag [#allocation4], 1
    %2306 = vsyncpa %s2305, 1
    %2307 = vsyncpa [#allocation7], 1
    %s2308 = scalar_lea.sflag [#allocation7], 1
    %2309 = vsyncpa %s2308, 1
    %2310 = vsyncpa [#allocation5], 1
    %s2311 = scalar_lea.sflag [#allocation5], 1
    %2312 = vsyncpa %s2311, 1
    %2313 = vsyncpa [#allocation10], 1
    %s2314 = scalar_lea.sflag [#allocation10], 1
    %2315 = vsyncpa %s2314, 1

</llo_original>
